<compile_context>
chip_gen: v5e
topology: v5e:2x2
jax: 0.10.0
libtpu: 0.0.40
codegen_flags: <defaults>
</compile_context>

<pallas_src>
import functools

import jax
import jax.numpy as jnp
import numpy as np
from jax.experimental import pallas as pl
from jax.experimental.pallas import tpu as pltpu


def rune_block_kernel(
    x_ref,          # (bm, D)   f32 input rows
    wcat_ref,       # (D, 4D)   bf16 [Wa | Wb | Wg1 | Wg2] fused
    bcat_ref,       # (1, 4D)   f32  [ba | bb | bg1 | bg2] fused
    wp_ref,         # (2D, D)   bf16 [Wp1 ; Wp2] fused projection
    vec_ref,        # (3, D)    f32 rows: [bp, gamma, beta]
    out_ref,        # (bm, D)   f32
    *, tau: float, inv_tau: float, eps: float, D: int,
):
    x = x_ref[...]                                   # (bm, D) f32

    # --- GatedTropicalDifferenceAggregator -----------------------------
    # One wide bf16 MXU push: (bm, D) @ (D, 4D), f32 accumulation.
    y4 = jnp.dot(x.astype(jnp.bfloat16), wcat_ref[...],
                 preferred_element_type=jnp.float32) + bcat_ref[...]
    a = y4[:, 0 * D:1 * D]
    b = y4[:, 1 * D:2 * D]
    g1 = jax.nn.sigmoid(y4[:, 2 * D:3 * D])
    g2 = jax.nn.sigmoid(y4[:, 3 * D:4 * D])

    # Soft tropical max / min with a single exp + log1p per element:
    #   trop_max = tau*LSE([a,b]/tau)  = max(a,b) + tau*log1p(exp(-|a-b|/tau))
    #   trop_min = -tau*LSE([-a,-b]/tau) = min(a,b) - tau*log1p(exp(-|a-b|/tau))
    #   diff     = trop_max - trop_min = |a-b| + 2*tau*log1p(exp(-|a-b|/tau))
    ad = jnp.abs(a - b)
    sp = jnp.log1p(jnp.exp(ad * (-inv_tau)))         # exp arg <= 0, no divide
    trop_max = jnp.maximum(a, b) + tau * sp
    diff = ad + 2.0 * tau * sp

    f1 = g1 * trop_max                               # first D features
    f2 = g2 * diff                                   # second D features
    # concat([f1, f2]) @ [Wp1 ; Wp2]  — single K=2D bf16 dot, f32 accumulate.
    f = jnp.concatenate([f1, f2], axis=-1).astype(jnp.bfloat16)   # (bm, 2D)

    # --- projection (2D -> D), dropout=identity (eval), residual, LayerNorm
    bp = vec_ref[0:1, :]
    gamma = vec_ref[1:2, :]
    beta = vec_ref[2:3, :]
    proj = jnp.dot(f, wp_ref[...], preferred_element_type=jnp.float32) + bp
    h = x + proj                                     # f32 residual

    # Single-pass LN stats: 2 cross-lane reductions instead of 3.
    s1 = jnp.sum(h, axis=-1, keepdims=True)
    s2 = jnp.sum(h * h, axis=-1, keepdims=True)
    mu = s1 * (1.0 / D)
    var = s2 * (1.0 / D) - mu * mu
    y = (h - mu) * jax.lax.rsqrt(var + eps)
    out_ref[...] = y * gamma + beta


def rune_block(x, params, *, tau=0.2, eps=1e-5, bm=128,
               single_buffer_weights=False):
    """Fused RUNEBlock forward.  params as produced by make_params."""
    (wa, ba, wb, bb, wg1, bg1, wg2, bg2, wp1, wp2, bp, gamma, beta) = params
    B, D = x.shape
    assert D % 128 == 0, "D must be a multiple of 128 for lane-dense tiles"
    bm = min(bm, B)
    assert B % bm == 0, "B must be a multiple of the batch tile"

    # Host-side weight fusion + bf16 cast (one-time under jit / const-folded).
    wcat = jnp.concatenate([wa, wb, wg1, wg2], axis=1).astype(jnp.bfloat16)
    bcat = jnp.concatenate([ba, bb, bg1, bg2], axis=1)               # (1, 4D) f32
    wp = jnp.concatenate([wp1, wp2], axis=0).astype(jnp.bfloat16)    # (2D, D)
    vecs = jnp.concatenate([bp, gamma, beta], axis=0)                # (3, D) f32

    # Optionally single-buffer the grid-invariant constants (v7x / large D:
    # halves constant VMEM residency; irrelevant at small D).
    const_kw = ({"pipeline_mode": pl.Buffered(1)}
                if single_buffer_weights else {})

    row_spec = pl.BlockSpec((bm, D), lambda i: (i, 0))
    # Grid-invariant blocks: index_map is constant so Pallas fetches them once.
    # TODO(synk): for D >= ~1024 on v7x (64 MiB VMEM), additionally N-tile the
    # (D, 4D) fused weight with a second grid axis so only (D, Dn) tiles are
    # resident; unnecessary at these sizes.
    wcat_spec = pl.BlockSpec((D, 4 * D), lambda i: (0, 0), **const_kw)
    bcat_spec = pl.BlockSpec((1, 4 * D), lambda i: (0, 0), **const_kw)
    wp_spec = pl.BlockSpec((2 * D, D), lambda i: (0, 0), **const_kw)
    vecs_spec = pl.BlockSpec((3, D), lambda i: (0, 0), **const_kw)

    in_specs = [row_spec, wcat_spec, bcat_spec, wp_spec, vecs_spec]

    # VMEM budget: double-buffered x/out tiles + (single- or double-buffered)
    # constants + headroom for vreg spills / internal scratch.
    nbuf_w = 1 if single_buffer_weights else 2
    resident = (2 * 2 * bm * D * 4                         # x + out, 2 bufs, f32
                + nbuf_w * (wcat.size * 2 + wp.size * 2    # bf16 weights
                            + bcat.size * 4 + vecs.size * 4))
    vmem_limit = min(max(resident + (16 << 20), 32 << 20), 64 << 20)

    cost = pl.CostEstimate(
        flops=12 * B * D * D,                         # 8BD^2 fused + 4BD^2 proj
        transcendentals=4 * B * D,                    # exp + log1p + 2 sigmoid
        bytes_accessed=(2 * (4 * D * D + 2 * D * D)   # bf16 weights
                        + 4 * (2 * B * D + 4 * D + 3 * D)),
    )

    kernel = functools.partial(rune_block_kernel, tau=tau,
                               inv_tau=1.0 / tau, eps=eps, D=D)
    return pl.pallas_call(
        kernel,
        out_shape=jax.ShapeDtypeStruct((B, D), jnp.float32),
        grid=(B // bm,),
        in_specs=in_specs,
        out_specs=row_spec,
        compiler_params=pltpu.CompilerParams(
            dimension_semantics=("parallel",),
            vmem_limit_bytes=vmem_limit),
        cost_estimate=cost,
    )(x, wcat, bcat, wp, vecs)


def make_params(key, D):
    ks = jax.random.split(key, 8)
    s = 1.0 / np.sqrt(D)
    wa = jax.random.normal(ks[0], (D, D), jnp.float32) * s
    wb = jax.random.normal(ks[1], (D, D), jnp.float32) * s
    wg1 = jax.random.normal(ks[2], (D, D), jnp.float32) * s
    wg2 = jax.random.normal(ks[3], (D, D), jnp.float32) * s
    wp1 = jax.random.normal(ks[4], (D, D), jnp.float32) * (1.0 / np.sqrt(2 * D))
    wp2 = jax.random.normal(ks[5], (D, D), jnp.float32) * (1.0 / np.sqrt(2 * D))
    ba = jnp.zeros((1, D), jnp.float32)
    bb = jnp.zeros((1, D), jnp.float32)
    bg1 = jnp.zeros((1, D), jnp.float32)
    bg2 = jnp.zeros((1, D), jnp.float32)
    bp = jax.random.normal(ks[6], (1, D), jnp.float32) * 0.01
    gamma = jnp.ones((1, D), jnp.float32)
    beta = jnp.zeros((1, D), jnp.float32)
    return (wa, ba, wb, bb, wg1, bg1, wg2, bg2, wp1, wp2, bp, gamma, beta)


def rune_block_ref(x, params, *, tau=0.2, eps=1e-5):
    (wa, ba, wb, bb, wg1, bg1, wg2, bg2, wp1, wp2, bp, gamma, beta) = params
    a = x @ wa + ba
    b = x @ wb + bb
    trop_max = tau * jax.nn.logsumexp(jnp.stack([a, b]) / tau, axis=0)
    trop_min = -tau * jax.nn.logsumexp(jnp.stack([-a, -b]) / tau, axis=0)
    diff = trop_max - trop_min
    g1 = jax.nn.sigmoid(x @ wg1 + bg1)
    g2 = jax.nn.sigmoid(x @ wg2 + bg2)
    proj = (g1 * trop_max) @ wp1 + (g2 * diff) @ wp2 + bp
    h = x + proj  # dropout is identity in eval mode
    mu = jnp.mean(h, axis=-1, keepdims=True)
    var = jnp.mean((h - mu) ** 2, axis=-1, keepdims=True)
    return (h - mu) * jax.lax.rsqrt(var + eps) * gamma + beta


if __name__ == "__main__":
    B, D = 512, 128       # lane-dense D, four batch tiles -> grid=(4,)
    key = jax.random.PRNGKey(0)
    kx, kp = jax.random.split(key)
    x = jax.random.normal(kx, (B, D), jnp.float32)
    params = make_params(kp, D)

    out = rune_block(x, params, bm=128)
    out = jax.block_until_ready(out)

    ref = rune_block_ref(x, params)
    # Tolerance loosened vs. the pure-f32 revision: the MXU now sees bf16
    # operands (f32 accumulation); residual add + LayerNorm remain f32.
    np.testing.assert_allclose(np.asarray(out), np.asarray(ref),
                               rtol=5e-2, atol=5e-2)
    print("KERNEL_OK")
</pallas_src>

<mosaic_0001>
module attributes {stable_mosaic.version = 11 : i64} {
  func.func @rune_block_kernel(%arg0: i32, %arg1: memref<128x128xf32, #tpu.memory_space<vmem>>, %arg2: memref<128x512xbf16, #tpu.memory_space<vmem>>, %arg3: memref<1x512xf32, #tpu.memory_space<vmem>>, %arg4: memref<256x128xbf16, #tpu.memory_space<vmem>>, %arg5: memref<3x128xf32, #tpu.memory_space<vmem>>, %arg6: memref<128x128xf32, #tpu.memory_space<vmem>>) attributes {dimension_semantics = [#tpu.dimension_semantics<parallel>], iteration_bounds = array<i64: 4>, scalar_prefetch = 0 : i64, scratch_operands = 0 : i64, tpu.core_type = #tpu.core_type<tc>, window_params = [{transform_indices = @transform_0, window_bounds = array<i64: 128, 128>}, {pipeline_mode = #tpu.pipeline_mode<synchronous>, transform_indices = @transform_1, window_bounds = array<i64: 128, 512>}, {pipeline_mode = #tpu.pipeline_mode<synchronous>, transform_indices = @transform_2, window_bounds = array<i64: 1, 512>}, {pipeline_mode = #tpu.pipeline_mode<synchronous>, transform_indices = @transform_3, window_bounds = array<i64: 256, 128>}, {pipeline_mode = #tpu.pipeline_mode<synchronous>, transform_indices = @transform_4, window_bounds = array<i64: 3, 128>}, {transform_indices = @transform_5, window_bounds = array<i64: 128, 128>}]} {
    %c0 = arith.constant 0 : index
    %c0_0 = arith.constant 0 : index
    %0 = vector.load %arg1[%c0, %c0_0] : memref<128x128xf32, #tpu.memory_space<vmem>>, vector<128x128xf32>
    %1 = arith.truncf %0 : vector<128x128xf32> to vector<128x128xbf16>
    %c0_1 = arith.constant 0 : index
    %c0_2 = arith.constant 0 : index
    %2 = vector.load %arg2[%c0_1, %c0_2] : memref<128x512xbf16, #tpu.memory_space<vmem>>, vector<128x512xbf16>
    %cst = arith.constant dense<0.000000e+00> : vector<128x512xf32>
    %3 = tpu.matmul %1, %2, %cst {dimension_numbers = #tpu.dot_dimension_numbers<[1], [0], [0], [1], [0, 0, 1, 1], [], []>} : vector<128x128xbf16>, vector<128x512xbf16>, vector<128x512xf32> -> vector<128x512xf32>
    %c0_3 = arith.constant 0 : index
    %c0_4 = arith.constant 0 : index
    %4 = vector.load %arg3[%c0_3, %c0_4] : memref<1x512xf32, #tpu.memory_space<vmem>>, vector<1x512xf32>
    %5 = vector.broadcast %4 : vector<1x512xf32> to vector<128x512xf32>
    %6 = arith.addf %3, %5 : vector<128x512xf32>
    %7 = vector.extract_strided_slice %6 {offsets = [0, 0], sizes = [128, 128], strides = [1, 1]} : vector<128x512xf32> to vector<128x128xf32>
    %8 = vector.extract_strided_slice %6 {offsets = [0, 128], sizes = [128, 128], strides = [1, 1]} : vector<128x512xf32> to vector<128x128xf32>
    %9 = vector.extract_strided_slice %6 {offsets = [0, 256], sizes = [128, 128], strides = [1, 1]} : vector<128x512xf32> to vector<128x128xf32>
    %10 = arith.negf %9 : vector<128x128xf32>
    %11 = math.exp %10 : vector<128x128xf32>
    %cst_5 = arith.constant 1.000000e+00 : f32
    %12 = vector.broadcast %cst_5 : f32 to vector<128x128xf32>
    %13 = arith.addf %12, %11 : vector<128x128xf32>
    %14 = arith.divf %12, %13 : vector<128x128xf32>
    %15 = vector.extract_strided_slice %6 {offsets = [0, 384], sizes = [128, 128], strides = [1, 1]} : vector<128x512xf32> to vector<128x128xf32>
    %16 = arith.negf %15 : vector<128x128xf32>
    %17 = math.exp %16 : vector<128x128xf32>
    %cst_6 = arith.constant 1.000000e+00 : f32
    %18 = vector.broadcast %cst_6 : f32 to vector<128x128xf32>
    %19 = arith.addf %18, %17 : vector<128x128xf32>
    %20 = arith.divf %18, %19 : vector<128x128xf32>
    %21 = arith.subf %7, %8 : vector<128x128xf32>
    %22 = math.absf %21 : vector<128x128xf32>
    %cst_7 = arith.constant -5.000000e+00 : f32
    %23 = vector.broadcast %cst_7 : f32 to vector<128x128xf32>
    %24 = arith.mulf %22, %23 : vector<128x128xf32>
    %25 = math.exp %24 : vector<128x128xf32>
    %26 = math.log1p %25 : vector<128x128xf32>
    %27 = arith.maximumf %7, %8 : vector<128x128xf32>
    %cst_8 = arith.constant 2.000000e-01 : f32
    %28 = vector.broadcast %cst_8 : f32 to vector<128x128xf32>
    %29 = arith.mulf %28, %26 : vector<128x128xf32>
    %30 = arith.addf %27, %29 : vector<128x128xf32>
    %cst_9 = arith.constant 4.000000e-01 : f32
    %31 = vector.broadcast %cst_9 : f32 to vector<128x128xf32>
    %32 = arith.mulf %31, %26 : vector<128x128xf32>
    %33 = arith.addf %22, %32 : vector<128x128xf32>
    %34 = arith.mulf %14, %30 : vector<128x128xf32>
    %35 = arith.mulf %20, %33 : vector<128x128xf32>
    %36 = tpu.concatenate %34, %35 in 1 : vector<128x128xf32>, vector<128x128xf32> -> vector<128x256xf32>
    %37 = arith.truncf %36 : vector<128x256xf32> to vector<128x256xbf16>
    %c0_10 = arith.constant 0 : index
    %c0_11 = arith.constant 0 : index
    %38 = vector.load %arg5[%c0_10, %c0_11] : memref<3x128xf32, #tpu.memory_space<vmem>>, vector<1x128xf32>
    %c1 = arith.constant 1 : index
    %c0_12 = arith.constant 0 : index
    %39 = vector.load %arg5[%c1, %c0_12] : memref<3x128xf32, #tpu.memory_space<vmem>>, vector<1x128xf32>
    %c2 = arith.constant 2 : index
    %c0_13 = arith.constant 0 : index
    %40 = vector.load %arg5[%c2, %c0_13] : memref<3x128xf32, #tpu.memory_space<vmem>>, vector<1x128xf32>
    %c0_14 = arith.constant 0 : index
    %c0_15 = arith.constant 0 : index
    %41 = vector.load %arg4[%c0_14, %c0_15] : memref<256x128xbf16, #tpu.memory_space<vmem>>, vector<256x128xbf16>
    %cst_16 = arith.constant dense<0.000000e+00> : vector<128x128xf32>
    %42 = tpu.matmul %37, %41, %cst_16 {dimension_numbers = #tpu.dot_dimension_numbers<[1], [0], [0], [1], [0, 0, 1, 1], [], []>} : vector<128x256xbf16>, vector<256x128xbf16>, vector<128x128xf32> -> vector<128x128xf32>
    %43 = vector.broadcast %38 : vector<1x128xf32> to vector<128x128xf32>
    %44 = arith.addf %42, %43 : vector<128x128xf32>
    %45 = arith.addf %0, %44 : vector<128x128xf32>
    %cst_17 = arith.constant dense<0.000000e+00> : vector<128xf32>
    %46 = vector.multi_reduction <add>, %45, %cst_17 [1] : vector<128x128xf32> to vector<128xf32>
    %47 = vector.shape_cast %46 : vector<128xf32> to vector<128x1xf32>
    %48 = arith.mulf %45, %45 : vector<128x128xf32>
    %cst_18 = arith.constant dense<0.000000e+00> : vector<128xf32>
    %49 = vector.multi_reduction <add>, %48, %cst_18 [1] : vector<128x128xf32> to vector<128xf32>
    %50 = vector.shape_cast %49 : vector<128xf32> to vector<128x1xf32>
    %cst_19 = arith.constant 7.812500e-03 : f32
    %51 = vector.broadcast %cst_19 : f32 to vector<128x1xf32>
    %52 = arith.mulf %47, %51 : vector<128x1xf32>
    %cst_20 = arith.constant 7.812500e-03 : f32
    %53 = vector.broadcast %cst_20 : f32 to vector<128x1xf32>
    %54 = arith.mulf %50, %53 : vector<128x1xf32>
    %55 = arith.mulf %52, %52 : vector<128x1xf32>
    %56 = arith.subf %54, %55 : vector<128x1xf32>
    %57 = vector.broadcast %52 : vector<128x1xf32> to vector<128x128xf32>
    %58 = arith.subf %45, %57 : vector<128x128xf32>
    %cst_21 = arith.constant 9.99999974E-6 : f32
    %59 = vector.broadcast %cst_21 : f32 to vector<128x1xf32>
    %60 = arith.addf %56, %59 : vector<128x1xf32>
    %61 = math.rsqrt %60 : vector<128x1xf32>
    %62 = vector.broadcast %61 : vector<128x1xf32> to vector<128x128xf32>
    %63 = arith.mulf %58, %62 : vector<128x128xf32>
    %64 = vector.broadcast %39 : vector<1x128xf32> to vector<128x128xf32>
    %65 = arith.mulf %63, %64 : vector<128x128xf32>
    %66 = vector.broadcast %40 : vector<1x128xf32> to vector<128x128xf32>
    %67 = arith.addf %65, %66 : vector<128x128xf32>
    %c0_22 = arith.constant 0 : index
    %c0_23 = arith.constant 0 : index
    %68 = vector.load %arg6[%c0_22, %c0_23] : memref<128x128xf32, #tpu.memory_space<vmem>>, vector<128x128xf32>
    tpu.vector_store %arg6[%c0_22, %c0_23], %67 {strides = array<i32>} : memref<128x128xf32, #tpu.memory_space<vmem>>, vector<128x128xf32>,
    return
  }
  func.func @transform_0(%arg0: i32) -> (i32, i32) {
    %c0_i32 = arith.constant 0 : i32
    %c0_i32_0 = arith.constant 0 : i32
    return %arg0, %c0_i32 : i32, i32
  }
  func.func @transform_1(%arg0: i32) -> (i32, i32) {
    %c0_i32 = arith.constant 0 : i32
    %c0_i32_0 = arith.constant 0 : i32
    %c0_i32_1 = arith.constant 0 : i32
    return %c0_i32, %c0_i32_0 : i32, i32
  }
  func.func @transform_2(%arg0: i32) -> (i32, i32) {
    %c0_i32 = arith.constant 0 : i32
    %c0_i32_0 = arith.constant 0 : i32
    %c0_i32_1 = arith.constant 0 : i32
    return %c0_i32, %c0_i32_0 : i32, i32
  }
  func.func @transform_3(%arg0: i32) -> (i32, i32) {
    %c0_i32 = arith.constant 0 : i32
    %c0_i32_0 = arith.constant 0 : i32
    %c0_i32_1 = arith.constant 0 : i32
    return %c0_i32, %c0_i32_0 : i32, i32
  }
  func.func @transform_4(%arg0: i32) -> (i32, i32) {
    %c0_i32 = arith.constant 0 : i32
    %c0_i32_0 = arith.constant 0 : i32
    %c0_i32_1 = arith.constant 0 : i32
    return %c0_i32, %c0_i32_0 : i32, i32
  }
  func.func @transform_5(%arg0: i32) -> (i32, i32) {
    %c0_i32 = arith.constant 0 : i32
    %c0_i32_0 = arith.constant 0 : i32
    return %arg0, %c0_i32 : i32, i32
  }
}

</mosaic_0001>

<llo_original>
// kernel: tpu_custom_call.1
$region0: #{tpu_custom_call.1}
  #allocation0 [shape = 'u32[]', space=smem, size = 0x4, offset = 0x4, fixed_abs, tag = 'smem constant byte address 0x4 - core index']
  #allocation1 [shape = 'u32[72,128]{1,0:T(1,128)}', space=vmem, size = 0x9000, scoped, tag = 'internal scratch']
  %s0 = inlined_call_operand.hbm [shape: f32[512,128], index: 0, kind: input, shape index: {}]
  %s1 = inlined_call_operand.hbm [shape: bf16[128,512], index: 1, kind: input, shape index: {}]
  %s2 = inlined_call_operand.hbm [shape: f32[1,512], index: 2, kind: input, shape index: {}]
  %s3 = inlined_call_operand.hbm [shape: bf16[256,128], index: 3, kind: input, shape index: {}]
  %s4 = inlined_call_operand.hbm [shape: f32[3,128], index: 4, kind: input, shape index: {}]
  %s5 = inlined_call_operand.hbm [shape: f32[512,128], index: 5, kind: output, shape index: {}]
  %s6 = sld [smem:[#allocation0]]
  $region73: #{tpu_custom_call.1} parent=0
    _
  %s8 = ssub.s32 1, %s6
  %s9 = scalar_select 0, %s8, %s6
  $region1: #{tpu_custom_call.1} parent=0
    #allocation2 [shape = 'u8[131072]{0}', space=vmem, size = 0x20000, scoped, tag = 'input window, operand 0']
    #allocation3 [shape = 's32[2]{0}', space=sflag, size = 0x8, scoped, tag = 'scoped memory for tpu_custom_call.1']
    #allocation4 [shape = 's32[2]{0}', space=sflag, size = 0x8, scoped, tag = 'scoped memory for tpu_custom_call.1']
    #allocation5 [shape = 'u8[131072]{0}', space=vmem, size = 0x20000, scoped, tag = 'input window, operand 1, single buffered']
    #allocation6 [shape = 's32[1]{0}', space=sflag, size = 0x4, scoped, tag = 'scoped memory for tpu_custom_call.1']
    #allocation7 [shape = 'u8[2048]{0}', space=vmem, size = 0x800, scoped, tag = 'input window, operand 2, single buffered']
    #allocation8 [shape = 'u8[65536]{0}', space=vmem, size = 0x10000, scoped, tag = 'input window, operand 3, single buffered']
    #allocation9 [shape = 's32[1]{0}', space=sflag, size = 0x4, scoped, tag = 'scoped memory for tpu_custom_call.1']
    #allocation10 [shape = 'u8[2048]{0}', space=vmem, size = 0x800, scoped, tag = 'input window, operand 4, single buffered']
    #allocation11 [shape = 'u8[131072]{0}', space=vmem, size = 0x20000, scoped, tag = 'output window, operand 0']
    %10 = vsyncpa [#allocation3], 0
    %s11 = scalar_lea.sflag [#allocation3], 1
    %12 = vsyncpa %s11, 0
    %13 = vsyncpa [#allocation6], 0
    %14 = vsyncpa [#allocation9], 0
    %15 = vsyncpa [#allocation4], 0
    %s16 = scalar_lea.sflag [#allocation4], 1
    %17 = vsyncpa %s16, 0
    loop: start=0, step=1, limit=6
    $region2: #{tpu_custom_call.1} parent=1 // loop_pre_header
      _
    $region3: #{tpu_custom_call.1} parent=1 // loop_header
      %s19 = sphi 0, %s23
      %p20 = scmp.ge.s32.totalorder %s19, 6
      %s29 = sphi 0, %s31
      %s32 = sphi 0, %s29
      %s33 = sphi 0, %s32
      %s49 = sphi 0, %s33
      %s53 = sphi 0, %s53
      %s55 = sphi 0, %s53
      %s56 = sphi 0, %s55
      %s70 = sphi 0, %s56
      %s74 = sphi 0, %s74
      %s76 = sphi 0, %s74
      %s77 = sphi 0, %s76
      %s91 = sphi 0, %s77
      %s95 = sphi 0, %s95
      %s97 = sphi 0, %s95
      %s98 = sphi 0, %s97
      %s112 = sphi 0, %s98
      %s116 = sphi 0, %s116
      %s118 = sphi 0, %s116
      %s119 = sphi 0, %s118
      %s133 = sphi 0, %s119
      %s139 = sphi 0, %s141
      %s142 = sphi 0, %s139
      %s143 = sphi 0, %s142
      %s159 = sphi 0, %s143
    $region4: #{tpu_custom_call.1} parent=1 // loop_header_branch
      %22 = sbr.rel (%p20) target = $region8
    $region5: #{tpu_custom_call.1} parent=1 // loop_body
      %s24 = ssub.s32 %s19, 1
      %s25 = ssub.s32 %s19, 2
      %s26 = sadd.s32 %s19, 1
      %s27 = ssub.s32 %s19, %s26
      %p28 = scmp.eq.s32.totalorder %s27, 0
      %s30 = sadd.s32 %s29, 1
      %s31 = scalar_select %p28, %s29, %s30
      %p34 = pneg %p28
      %p35 = scmp.eq.s32.totalorder %s19, 3
      %p36 = por %p34, %p35
      %p37 = scmp.ne.s32.totalorder %s29, %s32
      %p38 = scmp.eq.s32.totalorder %s19, 0
      %p39 = por %p37, %p38
      %p40 = scmp.ne.s32.totalorder %s29, %s32
      %p41 = scmp.eq.s32.totalorder %s24, 3
      %p42 = por %p40, %p41
      %p43 = scmp.ne.s32.totalorder %s32, %s33
      %p44 = scmp.eq.s32.totalorder %s24, 0
      %p45 = por %p43, %p44
      %p46 = scmp.ne.s32.totalorder %s32, %s33
      %p47 = scmp.eq.s32.totalorder %s25, 3
      %p48 = por %p46, %p47
      %p50 = scmp.ne.s32.totalorder %s33, %s49
      %p51 = scmp.eq.s32.totalorder %s25, 0
      %p52 = por %p50, %p51
      %s54 = sadd.s32 %s53, 1
      %p57 = scmp.eq.s32.totalorder %s19, 3
      %p58 = scmp.ne.s32.totalorder %s53, %s55
      %p59 = scmp.eq.s32.totalorder %s19, 0
      %p60 = por %p58, %p59
      %p61 = scmp.ne.s32.totalorder %s53, %s55
      %p62 = scmp.eq.s32.totalorder %s24, 3
      %p63 = por %p61, %p62
      %p64 = scmp.ne.s32.totalorder %s55, %s56
      %p65 = scmp.eq.s32.totalorder %s24, 0
      %p66 = por %p64, %p65
      %p67 = scmp.ne.s32.totalorder %s55, %s56
      %p68 = scmp.eq.s32.totalorder %s25, 3
      %p69 = por %p67, %p68
      %p71 = scmp.ne.s32.totalorder %s56, %s70
      %p72 = scmp.eq.s32.totalorder %s25, 0
      %p73 = por %p71, %p72
      %s75 = sadd.s32 %s74, 1
      %p78 = scmp.eq.s32.totalorder %s19, 3
      %p79 = scmp.ne.s32.totalorder %s74, %s76
      %p80 = scmp.eq.s32.totalorder %s19, 0
      %p81 = por %p79, %p80
      %p82 = scmp.ne.s32.totalorder %s74, %s76
      %p83 = scmp.eq.s32.totalorder %s24, 3
      %p84 = por %p82, %p83
      %p85 = scmp.ne.s32.totalorder %s76, %s77
      %p86 = scmp.eq.s32.totalorder %s24, 0
      %p87 = por %p85, %p86
      %p88 = scmp.ne.s32.totalorder %s76, %s77
      %p89 = scmp.eq.s32.totalorder %s25, 3
      %p90 = por %p88, %p89
      %p92 = scmp.ne.s32.totalorder %s77, %s91
      %p93 = scmp.eq.s32.totalorder %s25, 0
      %p94 = por %p92, %p93
      %s96 = sadd.s32 %s95, 1
      %p99 = scmp.eq.s32.totalorder %s19, 3
      %p100 = scmp.ne.s32.totalorder %s95, %s97
      %p101 = scmp.eq.s32.totalorder %s19, 0
      %p102 = por %p100, %p101
      %p103 = scmp.ne.s32.totalorder %s95, %s97
      %p104 = scmp.eq.s32.totalorder %s24, 3
      %p105 = por %p103, %p104
      %p106 = scmp.ne.s32.totalorder %s97, %s98
      %p107 = scmp.eq.s32.totalorder %s24, 0
      %p108 = por %p106, %p107
      %p109 = scmp.ne.s32.totalorder %s97, %s98
      %p110 = scmp.eq.s32.totalorder %s25, 3
      %p111 = por %p109, %p110
      %p113 = scmp.ne.s32.totalorder %s98, %s112
      %p114 = scmp.eq.s32.totalorder %s25, 0
      %p115 = por %p113, %p114
      %s117 = sadd.s32 %s116, 1
      %p120 = scmp.eq.s32.totalorder %s19, 3
      %p121 = scmp.ne.s32.totalorder %s116, %s118
      %p122 = scmp.eq.s32.totalorder %s19, 0
      %p123 = por %p121, %p122
      %p124 = scmp.ne.s32.totalorder %s116, %s118
      %p125 = scmp.eq.s32.totalorder %s24, 3
      %p126 = por %p124, %p125
      %p127 = scmp.ne.s32.totalorder %s118, %s119
      %p128 = scmp.eq.s32.totalorder %s24, 0
      %p129 = por %p127, %p128
      %p130 = scmp.ne.s32.totalorder %s118, %s119
      %p131 = scmp.eq.s32.totalorder %s25, 3
      %p132 = por %p130, %p131
      %p134 = scmp.ne.s32.totalorder %s119, %s133
      %p135 = scmp.eq.s32.totalorder %s25, 0
      %p136 = por %p134, %p135
      %s137 = ssub.s32 %s19, %s26
      %p138 = scmp.eq.s32.totalorder %s137, 0
      %s140 = sadd.s32 %s139, 1
      %s141 = scalar_select %p138, %s139, %s140
      %p144 = pneg %p138
      %p145 = scmp.eq.s32.totalorder %s19, 3
      %p146 = por %p144, %p145
      %p147 = scmp.ne.s32.totalorder %s139, %s142
      %p148 = scmp.eq.s32.totalorder %s19, 0
      %p149 = por %p147, %p148
      %p150 = scmp.ne.s32.totalorder %s139, %s142
      %p151 = scmp.eq.s32.totalorder %s24, 3
      %p152 = por %p150, %p151
      %p153 = scmp.ne.s32.totalorder %s142, %s143
      %p154 = scmp.eq.s32.totalorder %s24, 0
      %p155 = por %p153, %p154
      %p156 = scmp.ne.s32.totalorder %s142, %s143
      %p157 = scmp.eq.s32.totalorder %s25, 3
      %p158 = por %p156, %p157
      %p160 = scmp.ne.s32.totalorder %s143, %s159
      %p161 = scmp.eq.s32.totalorder %s25, 0
      %p162 = por %p160, %p161
      %p163 = scmp.le.s32.totalorder 1, %s19
      %p164 = scmp.lt.s32.totalorder %s19, 5
      %p165 = pnand %p163, %p164
      %p166 = pneg %p165
      // Predicated region
      $region9: #{tpu_custom_call.1} parent=5 // pred_check
        _
      $region10: #{tpu_custom_call.1} parent=5 // pred_check_branch
        %168 = sbr.rel (%p165) target = $region12
      $region11: #{tpu_custom_call.1} parent=5 // pred_region
        %s169 = ssub.s32 %s19, 1
        // Predicated region
        $region13: #{tpu_custom_call.1} parent=11 // pred_check
          %p170 = pneg %p66
        $region14: #{tpu_custom_call.1} parent=11 // pred_check_branch
          %172 = sbr.rel (%p170) target = $region16
        $region15: #{tpu_custom_call.1} parent=11 // pred_region
          %174 = vsyncadd [#allocation6], 0
          %s175 = sshll.u32 %s1, 4
          %s176 = int_to_ptr.hbm [resolvable:$true] %s175
          %s177 = sshll.u32 [#allocation5], 4
          %s178 = int_to_ptr.vmem [resolvable:$true] %s177
          %183 = dma.hbm_to_vmem [thread:$0]  %s176, 4096, %s178, [#allocation6], 256, 256, 16
        $region16: #{tpu_custom_call.1} parent=11 // pred_fallthru
          _
        // Predicated region
        $region17: #{tpu_custom_call.1} parent=11 // pred_check
          %p184 = pneg %p87
        $region18: #{tpu_custom_call.1} parent=11 // pred_check_branch
          %186 = sbr.rel (%p184) target = $region20
        $region19: #{tpu_custom_call.1} parent=11 // pred_region
          %188 = vsyncadd [#allocation6], 0
          %s190 = sshll.u32 %s2, 4
          %s191 = int_to_ptr.hbm [resolvable:$true] %s190
          %s192 = sshll.u32 [#allocation7], 4
          %s193 = int_to_ptr.vmem [resolvable:$true] %s192
          %195 = dma.hbm_to_vmem [thread:$0]  %s191, 64, %s193, [#allocation6]
        $region20: #{tpu_custom_call.1} parent=11 // pred_fallthru
          _
        // Predicated region
        $region21: #{tpu_custom_call.1} parent=11 // pred_check
          %p196 = pneg %p108
        $region22: #{tpu_custom_call.1} parent=11 // pred_check_branch
          %198 = sbr.rel (%p196) target = $region24
        $region23: #{tpu_custom_call.1} parent=11 // pred_region
          %200 = vsyncadd [#allocation9], 0
          %s201 = sshll.u32 %s3, 4
          %s202 = int_to_ptr.hbm [resolvable:$true] %s201
          %s203 = sshll.u32 [#allocation8], 4
          %s204 = int_to_ptr.vmem [resolvable:$true] %s203
          %209 = dma.hbm_to_vmem [thread:$0]  %s202, 2048, %s204, [#allocation9], 64, 64, 4
        $region24: #{tpu_custom_call.1} parent=11 // pred_fallthru
          _
        // Predicated region
        $region25: #{tpu_custom_call.1} parent=11 // pred_check
          %p210 = pneg %p129
        $region26: #{tpu_custom_call.1} parent=11 // pred_check_branch
          %212 = sbr.rel (%p210) target = $region28
        $region27: #{tpu_custom_call.1} parent=11 // pred_region
          %214 = vsyncadd [#allocation9], 0
          %s216 = sshll.u32 %s4, 4
          %s217 = int_to_ptr.hbm [resolvable:$true] %s216
          %s218 = sshll.u32 [#allocation10], 4
          %s219 = int_to_ptr.vmem [resolvable:$true] %s218
          %221 = dma.hbm_to_vmem [thread:$0]  %s217, 64, %s219, [#allocation9]
        $region28: #{tpu_custom_call.1} parent=11 // pred_fallthru
          _
      $region12: #{tpu_custom_call.1} parent=5 // pred_fallthru
        _
      %p222 = scmp.lt.s32.totalorder %s19, 4
      // Predicated region
      $region29: #{tpu_custom_call.1} parent=5 // pred_check
        %p223 = pneg %p222
      $region30: #{tpu_custom_call.1} parent=5 // pred_check_branch
        %225 = sbr.rel (%p223) target = $region32
      $region31: #{tpu_custom_call.1} parent=5 // pred_region
        // Predicated region
        $region33: #{tpu_custom_call.1} parent=31 // pred_check
          %p226 = pneg %p39
        $region34: #{tpu_custom_call.1} parent=31 // pred_check_branch
          %228 = sbr.rel (%p226) target = $region36
        $region35: #{tpu_custom_call.1} parent=31 // pred_region
          %s229 = sand.u32 %s29, 1
          %s230 = scalar_lea.sflag [#allocation3], %s229
          %s231 = sand.u32 %s29, 1
          %s232 = smul.addr %s231, 128
          %s233 = scalar_lea.vmem [#allocation2], %s232
          %s234 = smul.u32 16, %s19
          %236 = vsyncadd %s230, 0
          %s237 = smul.addr %s234, 8
          %s238 = scalar_lea.hbm %s0, %s237
          %s239 = sshll.u32 %s238, 4
          %s240 = int_to_ptr.hbm [resolvable:$true] %s239
          %s241 = sshll.u32 %s233, 4
          %s242 = int_to_ptr.vmem [resolvable:$true] %s241
          %247 = dma.hbm_to_vmem [thread:$0]  %s240, 2048, %s242, %s230, 128, 128, 8
        $region36: #{tpu_custom_call.1} parent=31 // pred_fallthru
          _
      $region32: #{tpu_custom_call.1} parent=5 // pred_fallthru
        _
      %p248 = scmp.le.s32.totalorder 1, %s19
      %p249 = scmp.lt.s32.totalorder %s19, 5
      %p250 = pnand %p248, %p249
      %p251 = pneg %p250
      // Predicated region
      $region37: #{tpu_custom_call.1} parent=5 // pred_check
        _
      $region38: #{tpu_custom_call.1} parent=5 // pred_check_branch
        %253 = sbr.rel (%p250) target = $region40
      $region39: #{tpu_custom_call.1} parent=5 // pred_region
        %s254 = ssub.s32 %s19, 1
        %s255 = sand.u32 %s32, 1
        %s256 = scalar_lea.sflag [#allocation3], %s255
        %s257 = sand.u32 %s32, 1
        %s258 = smul.addr %s257, 128
        %s259 = scalar_lea.vmem [#allocation2], %s258
        // Predicated region
        $region41: #{tpu_custom_call.1} parent=39 // pred_check
          %p260 = pneg %p45
        $region42: #{tpu_custom_call.1} parent=39 // pred_check_branch
          %262 = sbr.rel (%p260) target = $region44
        $region43: #{tpu_custom_call.1} parent=39 // pred_region
          %264 = dma.done %s256, 2048
        $region44: #{tpu_custom_call.1} parent=39 // pred_fallthru
          _
        // Predicated region
        $region45: #{tpu_custom_call.1} parent=39 // pred_check
          %p265 = pneg %p66
        $region46: #{tpu_custom_call.1} parent=39 // pred_check_branch
          %267 = sbr.rel (%p265) target = $region48
        $region47: #{tpu_custom_call.1} parent=39 // pred_region
          %269 = dma.done [#allocation6], 4096
        $region48: #{tpu_custom_call.1} parent=39 // pred_fallthru
          _
        // Predicated region
        $region49: #{tpu_custom_call.1} parent=39 // pred_check
          %p270 = pneg %p87
        $region50: #{tpu_custom_call.1} parent=39 // pred_check_branch
          %272 = sbr.rel (%p270) target = $region52
        $region51: #{tpu_custom_call.1} parent=39 // pred_region
          %274 = dma.done [#allocation6], 64
        $region52: #{tpu_custom_call.1} parent=39 // pred_fallthru
          _
        // Predicated region
        $region53: #{tpu_custom_call.1} parent=39 // pred_check
          %p275 = pneg %p108
        $region54: #{tpu_custom_call.1} parent=39 // pred_check_branch
          %277 = sbr.rel (%p275) target = $region56
        $region55: #{tpu_custom_call.1} parent=39 // pred_region
          %279 = dma.done [#allocation9], 2048
        $region56: #{tpu_custom_call.1} parent=39 // pred_fallthru
          _
        // Predicated region
        $region57: #{tpu_custom_call.1} parent=39 // pred_check
          %p280 = pneg %p129
        $region58: #{tpu_custom_call.1} parent=39 // pred_check_branch
          %282 = sbr.rel (%p280) target = $region60
        $region59: #{tpu_custom_call.1} parent=39 // pred_region
          %284 = dma.done [#allocation9], 64
        $region60: #{tpu_custom_call.1} parent=39 // pred_fallthru
          _
        %s285 = sand.u32 %s32, 1
        %s286 = scalar_lea.sflag [#allocation3], %s285
        %s287 = sand.u32 %s32, 1
        %s288 = smul.addr %s287, 128
        %s289 = scalar_lea.vmem [#allocation2], %s288
        %p290 = pneg %p45
        %p291 = pneg %p42
        %p292 = pneg %p66
        %p293 = pneg %p63
        %p294 = pneg %p87
        %p295 = pneg %p84
        %p296 = pneg %p108
        %p297 = pneg %p105
        %p298 = pneg %p129
        %p299 = pneg %p126
        %p300 = pneg %p155
        %p301 = pneg %p152
        %s302 = sand.u32 %s142, 1
        %s303 = scalar_lea.sflag [#allocation4], %s302
        %s304 = sand.u32 %s142, 1
        %s305 = smul.addr %s304, 128
        %s306 = scalar_lea.vmem [#allocation11], %s305
        %s307 = smul.u32 16, %s24
        %s308 = smul.u32 16, %s24
        %v309 = vld [vmem:[%s259] sm:$0xff]
        %v310 = vld [vmem:[%s259 + $0x8] sm:$0xff]
        %v311 = vld [vmem:[%s259 + $0x10] sm:$0xff]
        %v312 = vld [vmem:[%s259 + $0x18] sm:$0xff]
        %v313 = vld [vmem:[%s259 + $0x20] sm:$0xff]
        %v314 = vld [vmem:[%s259 + $0x28] sm:$0xff]
        %v315 = vld [vmem:[%s259 + $0x30] sm:$0xff]
        %v316 = vld [vmem:[%s259 + $0x38] sm:$0xff]
        %v317 = vld [vmem:[%s259 + $0x40] sm:$0xff]
        %v318 = vld [vmem:[%s259 + $0x48] sm:$0xff]
        %v319 = vld [vmem:[%s259 + $0x50] sm:$0xff]
        %v320 = vld [vmem:[%s259 + $0x58] sm:$0xff]
        %v321 = vld [vmem:[%s259 + $0x60] sm:$0xff]
        %v322 = vld [vmem:[%s259 + $0x68] sm:$0xff]
        %v323 = vld [vmem:[%s259 + $0x70] sm:$0xff]
        %v324 = vld [vmem:[%s259 + $0x78] sm:$0xff]
        %v325 = vpack.c.bf16 %v310, %v309
        %v326 = vpack.c.bf16 %v312, %v311
        %v327 = vpack.c.bf16 %v314, %v313
        %v328 = vpack.c.bf16 %v316, %v315
        %v329 = vpack.c.bf16 %v318, %v317
        %v330 = vpack.c.bf16 %v320, %v319
        %v331 = vpack.c.bf16 %v322, %v321
        %v332 = vpack.c.bf16 %v324, %v323
        %v333 = vld [vmem:[#allocation5] sm:$0xff]
        %v334 = vld [vmem:[#allocation5 + $0x8] sm:$0xff]
        %v335 = vld [vmem:[#allocation5 + $0x10] sm:$0xff]
        %v336 = vld [vmem:[#allocation5 + $0x18] sm:$0xff]
        %v337 = vld [vmem:[#allocation5 + $0x20] sm:$0xff]
        %v338 = vld [vmem:[#allocation5 + $0x28] sm:$0xff]
        %v339 = vld [vmem:[#allocation5 + $0x30] sm:$0xff]
        %v340 = vld [vmem:[#allocation5 + $0x38] sm:$0xff]
        %v341 = vld [vmem:[#allocation5 + $0x40] sm:$0xff]
        %v342 = vld [vmem:[#allocation5 + $0x48] sm:$0xff]
        %v343 = vld [vmem:[#allocation5 + $0x50] sm:$0xff]
        %v344 = vld [vmem:[#allocation5 + $0x58] sm:$0xff]
        %v345 = vld [vmem:[#allocation5 + $0x60] sm:$0xff]
        %v346 = vld [vmem:[#allocation5 + $0x68] sm:$0xff]
        %v347 = vld [vmem:[#allocation5 + $0x70] sm:$0xff]
        %v348 = vld [vmem:[#allocation5 + $0x78] sm:$0xff]
        %v349 = vld [vmem:[#allocation5 + $0x80] sm:$0xff]
        %v350 = vld [vmem:[#allocation5 + $0x88] sm:$0xff]
        %v351 = vld [vmem:[#allocation5 + $0x90] sm:$0xff]
        %v352 = vld [vmem:[#allocation5 + $0x98] sm:$0xff]
        %v353 = vld [vmem:[#allocation5 + $0xa0] sm:$0xff]
        %v354 = vld [vmem:[#allocation5 + $0xa8] sm:$0xff]
        %v355 = vld [vmem:[#allocation5 + $0xb0] sm:$0xff]
        %v356 = vld [vmem:[#allocation5 + $0xb8] sm:$0xff]
        %v357 = vld [vmem:[#allocation5 + $0xc0] sm:$0xff]
        %v358 = vld [vmem:[#allocation5 + $0xc8] sm:$0xff]
        %v359 = vld [vmem:[#allocation5 + $0xd0] sm:$0xff]
        %v360 = vld [vmem:[#allocation5 + $0xd8] sm:$0xff]
        %v361 = vld [vmem:[#allocation5 + $0xe0] sm:$0xff]
        %v362 = vld [vmem:[#allocation5 + $0xe8] sm:$0xff]
        %v363 = vld [vmem:[#allocation5 + $0xf0] sm:$0xff]
        %v364 = vld [vmem:[#allocation5 + $0xf8] sm:$0xff]
        %v365 = vld [vmem:[#allocation7] sm:$0xf]
        %v367 = vperm.slane %v365, 0
        %v368 = vperm.slane %v365, 1
        %v369 = vperm.slane %v365, 2
        %v370 = vperm.slane %v365, 3
        %v407 = vunpack.c.l.b16 %v333
        %v408 = vunpack.c.h.b16 %v333
        %v409 = vunpack.c.l.b16 %v334
        %v410 = vunpack.c.h.b16 %v334
        %v411 = vunpack.c.l.b16 %v335
        %v412 = vunpack.c.h.b16 %v335
        %v413 = vunpack.c.l.b16 %v336
        %v414 = vunpack.c.h.b16 %v336
        %v415 = vunpack.c.l.b16 %v337
        %v416 = vunpack.c.h.b16 %v337
        %v417 = vunpack.c.l.b16 %v338
        %v418 = vunpack.c.h.b16 %v338
        %v419 = vunpack.c.l.b16 %v339
        %v420 = vunpack.c.h.b16 %v339
        %v421 = vunpack.c.l.b16 %v340
        %v422 = vunpack.c.h.b16 %v340
        %v423 = vunpack.c.l.b16 %v341
        %v424 = vunpack.c.h.b16 %v341
        %v425 = vunpack.c.l.b16 %v342
        %v426 = vunpack.c.h.b16 %v342
        %v427 = vunpack.c.l.b16 %v343
        %v428 = vunpack.c.h.b16 %v343
        %v429 = vunpack.c.l.b16 %v344
        %v430 = vunpack.c.h.b16 %v344
        %v431 = vunpack.c.l.b16 %v345
        %v432 = vunpack.c.h.b16 %v345
        %v433 = vunpack.c.l.b16 %v346
        %v434 = vunpack.c.h.b16 %v346
        %v435 = vunpack.c.l.b16 %v347
        %v436 = vunpack.c.h.b16 %v347
        %v437 = vunpack.c.l.b16 %v348
        %v438 = vunpack.c.h.b16 %v348
        %v439 = vunpack.c.l.b16 %v349
        %v440 = vunpack.c.h.b16 %v349
        %v441 = vunpack.c.l.b16 %v350
        %v442 = vunpack.c.h.b16 %v350
        %v443 = vunpack.c.l.b16 %v351
        %v444 = vunpack.c.h.b16 %v351
        %v445 = vunpack.c.l.b16 %v352
        %v446 = vunpack.c.h.b16 %v352
        %v447 = vunpack.c.l.b16 %v353
        %v448 = vunpack.c.h.b16 %v353
        %v449 = vunpack.c.l.b16 %v354
        %v450 = vunpack.c.h.b16 %v354
        %v451 = vunpack.c.l.b16 %v355
        %v452 = vunpack.c.h.b16 %v355
        %v453 = vunpack.c.l.b16 %v356
        %v454 = vunpack.c.h.b16 %v356
        %v455 = vunpack.c.l.b16 %v357
        %v456 = vunpack.c.h.b16 %v357
        %v457 = vunpack.c.l.b16 %v358
        %v458 = vunpack.c.h.b16 %v358
        %v459 = vunpack.c.l.b16 %v359
        %v460 = vunpack.c.h.b16 %v359
        %v461 = vunpack.c.l.b16 %v360
        %v462 = vunpack.c.h.b16 %v360
        %v463 = vunpack.c.l.b16 %v361
        %v464 = vunpack.c.h.b16 %v361
        %v465 = vunpack.c.l.b16 %v362
        %v466 = vunpack.c.h.b16 %v362
        %v467 = vunpack.c.l.b16 %v363
        %v468 = vunpack.c.h.b16 %v363
        %v469 = vunpack.c.l.b16 %v364
        %v470 = vunpack.c.h.b16 %v364
        %v471 = vpack.c.b16 %v411, %v407
        %v472 = vpack.c.b16 %v412, %v408
        %v473 = vpack.c.b16 %v413, %v409
        %v474 = vpack.c.b16 %v414, %v410
        %v475 = vpack.c.b16 %v419, %v415
        %v476 = vpack.c.b16 %v420, %v416
        %v477 = vpack.c.b16 %v421, %v417
        %v478 = vpack.c.b16 %v422, %v418
        %v479 = vpack.c.b16 %v427, %v423
        %v480 = vpack.c.b16 %v428, %v424
        %v481 = vpack.c.b16 %v429, %v425
        %v482 = vpack.c.b16 %v430, %v426
        %v483 = vpack.c.b16 %v435, %v431
        %v484 = vpack.c.b16 %v436, %v432
        %v485 = vpack.c.b16 %v437, %v433
        %v486 = vpack.c.b16 %v438, %v434
        %v487 = vpack.c.b16 %v443, %v439
        %v488 = vpack.c.b16 %v444, %v440
        %v489 = vpack.c.b16 %v445, %v441
        %v490 = vpack.c.b16 %v446, %v442
        %v491 = vpack.c.b16 %v451, %v447
        %v492 = vpack.c.b16 %v452, %v448
        %v493 = vpack.c.b16 %v453, %v449
        %v494 = vpack.c.b16 %v454, %v450
        %v495 = vpack.c.b16 %v459, %v455
        %v496 = vpack.c.b16 %v460, %v456
        %v497 = vpack.c.b16 %v461, %v457
        %v498 = vpack.c.b16 %v462, %v458
        %v499 = vpack.c.b16 %v467, %v463
        %v500 = vpack.c.b16 %v468, %v464
        %v501 = vpack.c.b16 %v469, %v465
        %v502 = vpack.c.b16 %v470, %v466
        %535 = vmatpush.bf16.msra.mxu0 %v499
        %536 = vmatpush.bf16.msra.mxu0 %v495
        %537 = vmatpush.bf16.msra.mxu0 %v491
        %538 = vmatpush.bf16.msra.mxu0 %v487
        %539 = vmatpush.bf16.msra.mxu0 %v483
        %540 = vmatpush.bf16.msra.mxu0 %v479
        %541 = vmatpush.bf16.msra.mxu0 %v475
        %542 = vmatpush.bf16.msra.mxu0 %v471
        %543 = vmatmul.bf16.gmra.mxu0 %v325
        %v544 = vpop.f32.mrf.mxu0
        %v545 = vadd.f32 %v367, %v544
        %v546 = vpop.f32.mrf.mxu0
        %v547 = vadd.f32 %v367, %v546
        %548 = vmatmul.bf16.gmra.mxu0 %v326
        %v549 = vpop.f32.mrf.mxu0
        %v550 = vadd.f32 %v367, %v549
        %v551 = vpop.f32.mrf.mxu0
        %v552 = vadd.f32 %v367, %v551
        %553 = vmatmul.bf16.gmra.mxu0 %v327
        %v554 = vpop.f32.mrf.mxu0
        %v555 = vadd.f32 %v367, %v554
        %v556 = vpop.f32.mrf.mxu0
        %v557 = vadd.f32 %v367, %v556
        %558 = vmatmul.bf16.gmra.mxu0 %v328
        %v559 = vpop.f32.mrf.mxu0
        %v560 = vadd.f32 %v367, %v559
        %v561 = vpop.f32.mrf.mxu0
        %v562 = vadd.f32 %v367, %v561
        %563 = vmatmul.bf16.gmra.mxu0 %v329
        %v564 = vpop.f32.mrf.mxu0
        %v565 = vadd.f32 %v367, %v564
        %v566 = vpop.f32.mrf.mxu0
        %v567 = vadd.f32 %v367, %v566
        %568 = vmatmul.bf16.gmra.mxu0 %v330
        %v569 = vpop.f32.mrf.mxu0
        %v570 = vadd.f32 %v367, %v569
        %v571 = vpop.f32.mrf.mxu0
        %v572 = vadd.f32 %v367, %v571
        %573 = vmatmul.bf16.gmra.mxu0 %v331
        %v574 = vpop.f32.mrf.mxu0
        %v575 = vadd.f32 %v367, %v574
        %v576 = vpop.f32.mrf.mxu0
        %v577 = vadd.f32 %v367, %v576
        %578 = vmatmul.bf16.gmra.mxu0 %v332
        %v579 = vpop.f32.mrf.mxu0
        %v580 = vadd.f32 %v367, %v579
        %v581 = vpop.f32.mrf.mxu0
        %v582 = vadd.f32 %v367, %v581
        %583 = vdwg.mxu0
        %584 = vmatpush.bf16.msra.mxu0 %v500
        %585 = vmatpush.bf16.msra.mxu0 %v496
        %586 = vmatpush.bf16.msra.mxu0 %v492
        %587 = vmatpush.bf16.msra.mxu0 %v488
        %588 = vmatpush.bf16.msra.mxu0 %v484
        %589 = vmatpush.bf16.msra.mxu0 %v480
        %590 = vmatpush.bf16.msra.mxu0 %v476
        %591 = vmatpush.bf16.msra.mxu0 %v472
        %592 = vmatmul.bf16.gmra.mxu0 %v325
        %v593 = vpop.f32.mrf.mxu0
        %v594 = vadd.f32 %v368, %v593
        %v595 = vpop.f32.mrf.mxu0
        %v596 = vadd.f32 %v368, %v595
        %597 = vmatmul.bf16.gmra.mxu0 %v326
        %v598 = vpop.f32.mrf.mxu0
        %v599 = vadd.f32 %v368, %v598
        %v600 = vpop.f32.mrf.mxu0
        %v601 = vadd.f32 %v368, %v600
        %602 = vmatmul.bf16.gmra.mxu0 %v327
        %v603 = vpop.f32.mrf.mxu0
        %v604 = vadd.f32 %v368, %v603
        %v605 = vpop.f32.mrf.mxu0
        %v606 = vadd.f32 %v368, %v605
        %607 = vmatmul.bf16.gmra.mxu0 %v328
        %v608 = vpop.f32.mrf.mxu0
        %v609 = vadd.f32 %v368, %v608
        %v610 = vpop.f32.mrf.mxu0
        %v611 = vadd.f32 %v368, %v610
        %612 = vmatmul.bf16.gmra.mxu0 %v329
        %v613 = vpop.f32.mrf.mxu0
        %v614 = vadd.f32 %v368, %v613
        %v615 = vpop.f32.mrf.mxu0
        %v616 = vadd.f32 %v368, %v615
        %617 = vmatmul.bf16.gmra.mxu0 %v330
        %v618 = vpop.f32.mrf.mxu0
        %v619 = vadd.f32 %v368, %v618
        %v620 = vpop.f32.mrf.mxu0
        %v621 = vadd.f32 %v368, %v620
        %622 = vmatmul.bf16.gmra.mxu0 %v331
        %v623 = vpop.f32.mrf.mxu0
        %v624 = vadd.f32 %v368, %v623
        %v625 = vpop.f32.mrf.mxu0
        %v626 = vadd.f32 %v368, %v625
        %627 = vmatmul.bf16.gmra.mxu0 %v332
        %v628 = vpop.f32.mrf.mxu0
        %v629 = vadd.f32 %v368, %v628
        %v630 = vpop.f32.mrf.mxu0
        %v631 = vadd.f32 %v368, %v630
        %632 = vdwg.mxu0
        %633 = vmatpush.bf16.msra.mxu0 %v501
        %634 = vmatpush.bf16.msra.mxu0 %v497
        %635 = vmatpush.bf16.msra.mxu0 %v493
        %636 = vmatpush.bf16.msra.mxu0 %v489
        %637 = vmatpush.bf16.msra.mxu0 %v485
        %638 = vmatpush.bf16.msra.mxu0 %v481
        %639 = vmatpush.bf16.msra.mxu0 %v477
        %640 = vmatpush.bf16.msra.mxu0 %v473
        %641 = vmatmul.bf16.gmra.mxu0 %v325
        %v642 = vpop.f32.mrf.mxu0
        %v643 = vadd.f32 %v369, %v642
        %v644 = vpop.f32.mrf.mxu0
        %v645 = vadd.f32 %v369, %v644
        %646 = vmatmul.bf16.gmra.mxu0 %v326
        %v647 = vpop.f32.mrf.mxu0
        %v648 = vadd.f32 %v369, %v647
        %v649 = vpop.f32.mrf.mxu0
        %v650 = vadd.f32 %v369, %v649
        %651 = vmatmul.bf16.gmra.mxu0 %v327
        %v652 = vpop.f32.mrf.mxu0
        %v653 = vadd.f32 %v369, %v652
        %v654 = vpop.f32.mrf.mxu0
        %v655 = vadd.f32 %v369, %v654
        %656 = vmatmul.bf16.gmra.mxu0 %v328
        %v657 = vpop.f32.mrf.mxu0
        %v658 = vadd.f32 %v369, %v657
        %v659 = vpop.f32.mrf.mxu0
        %v660 = vadd.f32 %v369, %v659
        %661 = vmatmul.bf16.gmra.mxu0 %v329
        %v662 = vpop.f32.mrf.mxu0
        %v663 = vadd.f32 %v369, %v662
        %v664 = vpop.f32.mrf.mxu0
        %v665 = vadd.f32 %v369, %v664
        %666 = vmatmul.bf16.gmra.mxu0 %v330
        %v667 = vpop.f32.mrf.mxu0
        %v668 = vadd.f32 %v369, %v667
        %v669 = vpop.f32.mrf.mxu0
        %v670 = vadd.f32 %v369, %v669
        %671 = vmatmul.bf16.gmra.mxu0 %v331
        %v672 = vpop.f32.mrf.mxu0
        %v673 = vadd.f32 %v369, %v672
        %v674 = vpop.f32.mrf.mxu0
        %v675 = vadd.f32 %v369, %v674
        %676 = vmatmul.bf16.gmra.mxu0 %v332
        %v677 = vpop.f32.mrf.mxu0
        %v678 = vadd.f32 %v369, %v677
        %v679 = vpop.f32.mrf.mxu0
        %v680 = vadd.f32 %v369, %v679
        %681 = vdwg.mxu0
        %682 = vmatpush.bf16.msra.mxu0 %v502
        %683 = vmatpush.bf16.msra.mxu0 %v498
        %684 = vmatpush.bf16.msra.mxu0 %v494
        %685 = vmatpush.bf16.msra.mxu0 %v490
        %686 = vmatpush.bf16.msra.mxu0 %v486
        %687 = vmatpush.bf16.msra.mxu0 %v482
        %688 = vmatpush.bf16.msra.mxu0 %v478
        %689 = vmatpush.bf16.msra.mxu0 %v474
        %690 = vmatmul.bf16.gmra.mxu0 %v325
        %v691 = vpop.f32.mrf.mxu0
        %v692 = vadd.f32 %v370, %v691
        %v693 = vpop.f32.mrf.mxu0
        %v694 = vadd.f32 %v370, %v693
        %695 = vmatmul.bf16.gmra.mxu0 %v326
        %v696 = vpop.f32.mrf.mxu0
        %v697 = vadd.f32 %v370, %v696
        %v698 = vpop.f32.mrf.mxu0
        %v699 = vadd.f32 %v370, %v698
        %700 = vmatmul.bf16.gmra.mxu0 %v327
        %v701 = vpop.f32.mrf.mxu0
        %v702 = vadd.f32 %v370, %v701
        %v703 = vpop.f32.mrf.mxu0
        %v704 = vadd.f32 %v370, %v703
        %705 = vmatmul.bf16.gmra.mxu0 %v328
        %v706 = vpop.f32.mrf.mxu0
        %v707 = vadd.f32 %v370, %v706
        %v708 = vpop.f32.mrf.mxu0
        %v709 = vadd.f32 %v370, %v708
        %710 = vmatmul.bf16.gmra.mxu0 %v329
        %v711 = vpop.f32.mrf.mxu0
        %v712 = vadd.f32 %v370, %v711
        %v713 = vpop.f32.mrf.mxu0
        %v714 = vadd.f32 %v370, %v713
        %715 = vmatmul.bf16.gmra.mxu0 %v330
        %v716 = vpop.f32.mrf.mxu0
        %v717 = vadd.f32 %v370, %v716
        %v718 = vpop.f32.mrf.mxu0
        %v719 = vadd.f32 %v370, %v718
        %720 = vmatmul.bf16.gmra.mxu0 %v331
        %v721 = vpop.f32.mrf.mxu0
        %v722 = vadd.f32 %v370, %v721
        %v723 = vpop.f32.mrf.mxu0
        %v724 = vadd.f32 %v370, %v723
        %725 = vmatmul.bf16.gmra.mxu0 %v332
        %v726 = vpop.f32.mrf.mxu0
        %v727 = vadd.f32 %v370, %v726
        %v728 = vpop.f32.mrf.mxu0
        %v729 = vadd.f32 %v370, %v728
        %730 = vdwg.mxu0
        %v731 = vxor.u32 %v643, 2147483648
        %v732 = vxor.u32 %v645, 2147483648
        %v733 = vxor.u32 %v648, 2147483648
        %v734 = vxor.u32 %v650, 2147483648
        %v735 = vxor.u32 %v653, 2147483648
        %v736 = vxor.u32 %v655, 2147483648
        %v737 = vxor.u32 %v658, 2147483648
        %v738 = vxor.u32 %v660, 2147483648
        %v739 = vxor.u32 %v663, 2147483648
        %v740 = vxor.u32 %v665, 2147483648
        %v741 = vxor.u32 %v668, 2147483648
        %v742 = vxor.u32 %v670, 2147483648
        %v743 = vxor.u32 %v673, 2147483648
        %v744 = vxor.u32 %v675, 2147483648
        %v745 = vxor.u32 %v678, 2147483648
        %v746 = vxor.u32 %v680, 2147483648
        %v747 = vmul.f32 %v731, 1.442695
        %v748 = vpow.pop %v747
        %v749 = vmul.f32 %v732, 1.442695
        %v750 = vpow.pop %v749
        %v751 = vmul.f32 %v733, 1.442695
        %v752 = vpow.pop %v751
        %v753 = vmul.f32 %v734, 1.442695
        %v754 = vpow.pop %v753
        %v755 = vmul.f32 %v735, 1.442695
        %v756 = vpow.pop %v755
        %v757 = vmul.f32 %v736, 1.442695
        %v758 = vpow.pop %v757
        %v759 = vmul.f32 %v737, 1.442695
        %v760 = vpow.pop %v759
        %v761 = vmul.f32 %v738, 1.442695
        %v762 = vpow.pop %v761
        %v763 = vmul.f32 %v739, 1.442695
        %v764 = vpow.pop %v763
        %v765 = vmul.f32 %v740, 1.442695
        %v766 = vpow.pop %v765
        %v767 = vmul.f32 %v741, 1.442695
        %v768 = vpow.pop %v767
        %v769 = vmul.f32 %v742, 1.442695
        %v770 = vpow.pop %v769
        %v771 = vmul.f32 %v743, 1.442695
        %v772 = vpow.pop %v771
        %v773 = vmul.f32 %v744, 1.442695
        %v774 = vpow.pop %v773
        %v775 = vmul.f32 %v745, 1.442695
        %v776 = vpow.pop %v775
        %v777 = vmul.f32 %v746, 1.442695
        %v778 = vpow.pop %v777
        %v779 = vadd.f32 %v748, 1.0
        %v780 = vadd.f32 %v750, 1.0
        %v781 = vadd.f32 %v752, 1.0
        %v782 = vadd.f32 %v754, 1.0
        %v783 = vadd.f32 %v756, 1.0
        %v784 = vadd.f32 %v758, 1.0
        %v785 = vadd.f32 %v760, 1.0
        %v786 = vadd.f32 %v762, 1.0
        %v787 = vadd.f32 %v764, 1.0
        %v788 = vadd.f32 %v766, 1.0
        %v789 = vadd.f32 %v768, 1.0
        %v790 = vadd.f32 %v770, 1.0
        %v791 = vadd.f32 %v772, 1.0
        %v792 = vadd.f32 %v774, 1.0
        %v793 = vadd.f32 %v776, 1.0
        %v794 = vadd.f32 %v778, 1.0
        %v795 = vrcp.pop %v779
        %v796 = vmul.f32 %v779, %v795
        %v797 = vsub.f32 1.0, %v796
        %v798 = vmul.f32 %v795, %v797
        %v799 = vadd.f32 %v795, %v798
        %vm800 = vweird.f32 %v779
        %vm801 = vweird.f32 %v795
        %vm802 = vmor %vm800, %vm801
        %v803 = vsel %vm802, %v795, %v799
        %v804 = vand.u32 2147483647, %v779
        %vm805 = vcmp.eq.f32.partialorder %v804, 8.507059e+37
        %v806 = vand.u32 %v779, 2147483648
        %v807 = vor.u32 1.1754944e-38, %v806
        %v808 = vsel %vm805, %v807, %v803
        %v809 = vmul.f32 1.0, %v808
        %v810 = vrcp.pop %v780
        %v811 = vmul.f32 %v780, %v810
        %v812 = vsub.f32 1.0, %v811
        %v813 = vmul.f32 %v810, %v812
        %v814 = vadd.f32 %v810, %v813
        %vm815 = vweird.f32 %v780
        %vm816 = vweird.f32 %v810
        %vm817 = vmor %vm815, %vm816
        %v818 = vsel %vm817, %v810, %v814
        %v819 = vand.u32 2147483647, %v780
        %vm820 = vcmp.eq.f32.partialorder %v819, 8.507059e+37
        %v821 = vand.u32 %v780, 2147483648
        %v822 = vor.u32 1.1754944e-38, %v821
        %v823 = vsel %vm820, %v822, %v818
        %v824 = vmul.f32 1.0, %v823
        %v825 = vrcp.pop %v781
        %v826 = vmul.f32 %v781, %v825
        %v827 = vsub.f32 1.0, %v826
        %v828 = vmul.f32 %v825, %v827
        %v829 = vadd.f32 %v825, %v828
        %vm830 = vweird.f32 %v781
        %vm831 = vweird.f32 %v825
        %vm832 = vmor %vm830, %vm831
        %v833 = vsel %vm832, %v825, %v829
        %v834 = vand.u32 2147483647, %v781
        %vm835 = vcmp.eq.f32.partialorder %v834, 8.507059e+37
        %v836 = vand.u32 %v781, 2147483648
        %v837 = vor.u32 1.1754944e-38, %v836
        %v838 = vsel %vm835, %v837, %v833
        %v839 = vmul.f32 1.0, %v838
        %v840 = vrcp.pop %v782
        %v841 = vmul.f32 %v782, %v840
        %v842 = vsub.f32 1.0, %v841
        %v843 = vmul.f32 %v840, %v842
        %v844 = vadd.f32 %v840, %v843
        %vm845 = vweird.f32 %v782
        %vm846 = vweird.f32 %v840
        %vm847 = vmor %vm845, %vm846
        %v848 = vsel %vm847, %v840, %v844
        %v849 = vand.u32 2147483647, %v782
        %vm850 = vcmp.eq.f32.partialorder %v849, 8.507059e+37
        %v851 = vand.u32 %v782, 2147483648
        %v852 = vor.u32 1.1754944e-38, %v851
        %v853 = vsel %vm850, %v852, %v848
        %v854 = vmul.f32 1.0, %v853
        %v855 = vrcp.pop %v783
        %v856 = vmul.f32 %v783, %v855
        %v857 = vsub.f32 1.0, %v856
        %v858 = vmul.f32 %v855, %v857
        %v859 = vadd.f32 %v855, %v858
        %vm860 = vweird.f32 %v783
        %vm861 = vweird.f32 %v855
        %vm862 = vmor %vm860, %vm861
        %v863 = vsel %vm862, %v855, %v859
        %v864 = vand.u32 2147483647, %v783
        %vm865 = vcmp.eq.f32.partialorder %v864, 8.507059e+37
        %v866 = vand.u32 %v783, 2147483648
        %v867 = vor.u32 1.1754944e-38, %v866
        %v868 = vsel %vm865, %v867, %v863
        %v869 = vmul.f32 1.0, %v868
        %v870 = vrcp.pop %v784
        %v871 = vmul.f32 %v784, %v870
        %v872 = vsub.f32 1.0, %v871
        %v873 = vmul.f32 %v870, %v872
        %v874 = vadd.f32 %v870, %v873
        %vm875 = vweird.f32 %v784
        %vm876 = vweird.f32 %v870
        %vm877 = vmor %vm875, %vm876
        %v878 = vsel %vm877, %v870, %v874
        %v879 = vand.u32 2147483647, %v784
        %vm880 = vcmp.eq.f32.partialorder %v879, 8.507059e+37
        %v881 = vand.u32 %v784, 2147483648
        %v882 = vor.u32 1.1754944e-38, %v881
        %v883 = vsel %vm880, %v882, %v878
        %v884 = vmul.f32 1.0, %v883
        %v885 = vrcp.pop %v785
        %v886 = vmul.f32 %v785, %v885
        %v887 = vsub.f32 1.0, %v886
        %v888 = vmul.f32 %v885, %v887
        %v889 = vadd.f32 %v885, %v888
        %vm890 = vweird.f32 %v785
        %vm891 = vweird.f32 %v885
        %vm892 = vmor %vm890, %vm891
        %v893 = vsel %vm892, %v885, %v889
        %v894 = vand.u32 2147483647, %v785
        %vm895 = vcmp.eq.f32.partialorder %v894, 8.507059e+37
        %v896 = vand.u32 %v785, 2147483648
        %v897 = vor.u32 1.1754944e-38, %v896
        %v898 = vsel %vm895, %v897, %v893
        %v899 = vmul.f32 1.0, %v898
        %v900 = vrcp.pop %v786
        %v901 = vmul.f32 %v786, %v900
        %v902 = vsub.f32 1.0, %v901
        %v903 = vmul.f32 %v900, %v902
        %v904 = vadd.f32 %v900, %v903
        %vm905 = vweird.f32 %v786
        %vm906 = vweird.f32 %v900
        %vm907 = vmor %vm905, %vm906
        %v908 = vsel %vm907, %v900, %v904
        %v909 = vand.u32 2147483647, %v786
        %vm910 = vcmp.eq.f32.partialorder %v909, 8.507059e+37
        %v911 = vand.u32 %v786, 2147483648
        %v912 = vor.u32 1.1754944e-38, %v911
        %v913 = vsel %vm910, %v912, %v908
        %v914 = vmul.f32 1.0, %v913
        %v915 = vrcp.pop %v787
        %v916 = vmul.f32 %v787, %v915
        %v917 = vsub.f32 1.0, %v916
        %v918 = vmul.f32 %v915, %v917
        %v919 = vadd.f32 %v915, %v918
        %vm920 = vweird.f32 %v787
        %vm921 = vweird.f32 %v915
        %vm922 = vmor %vm920, %vm921
        %v923 = vsel %vm922, %v915, %v919
        %v924 = vand.u32 2147483647, %v787
        %vm925 = vcmp.eq.f32.partialorder %v924, 8.507059e+37
        %v926 = vand.u32 %v787, 2147483648
        %v927 = vor.u32 1.1754944e-38, %v926
        %v928 = vsel %vm925, %v927, %v923
        %v929 = vmul.f32 1.0, %v928
        %v930 = vrcp.pop %v788
        %v931 = vmul.f32 %v788, %v930
        %v932 = vsub.f32 1.0, %v931
        %v933 = vmul.f32 %v930, %v932
        %v934 = vadd.f32 %v930, %v933
        %vm935 = vweird.f32 %v788
        %vm936 = vweird.f32 %v930
        %vm937 = vmor %vm935, %vm936
        %v938 = vsel %vm937, %v930, %v934
        %v939 = vand.u32 2147483647, %v788
        %vm940 = vcmp.eq.f32.partialorder %v939, 8.507059e+37
        %v941 = vand.u32 %v788, 2147483648
        %v942 = vor.u32 1.1754944e-38, %v941
        %v943 = vsel %vm940, %v942, %v938
        %v944 = vmul.f32 1.0, %v943
        %v945 = vrcp.pop %v789
        %v946 = vmul.f32 %v789, %v945
        %v947 = vsub.f32 1.0, %v946
        %v948 = vmul.f32 %v945, %v947
        %v949 = vadd.f32 %v945, %v948
        %vm950 = vweird.f32 %v789
        %vm951 = vweird.f32 %v945
        %vm952 = vmor %vm950, %vm951
        %v953 = vsel %vm952, %v945, %v949
        %v954 = vand.u32 2147483647, %v789
        %vm955 = vcmp.eq.f32.partialorder %v954, 8.507059e+37
        %v956 = vand.u32 %v789, 2147483648
        %v957 = vor.u32 1.1754944e-38, %v956
        %v958 = vsel %vm955, %v957, %v953
        %v959 = vmul.f32 1.0, %v958
        %v960 = vrcp.pop %v790
        %v961 = vmul.f32 %v790, %v960
        %v962 = vsub.f32 1.0, %v961
        %v963 = vmul.f32 %v960, %v962
        %v964 = vadd.f32 %v960, %v963
        %vm965 = vweird.f32 %v790
        %vm966 = vweird.f32 %v960
        %vm967 = vmor %vm965, %vm966
        %v968 = vsel %vm967, %v960, %v964
        %v969 = vand.u32 2147483647, %v790
        %vm970 = vcmp.eq.f32.partialorder %v969, 8.507059e+37
        %v971 = vand.u32 %v790, 2147483648
        %v972 = vor.u32 1.1754944e-38, %v971
        %v973 = vsel %vm970, %v972, %v968
        %v974 = vmul.f32 1.0, %v973
        %v975 = vrcp.pop %v791
        %v976 = vmul.f32 %v791, %v975
        %v977 = vsub.f32 1.0, %v976
        %v978 = vmul.f32 %v975, %v977
        %v979 = vadd.f32 %v975, %v978
        %vm980 = vweird.f32 %v791
        %vm981 = vweird.f32 %v975
        %vm982 = vmor %vm980, %vm981
        %v983 = vsel %vm982, %v975, %v979
        %v984 = vand.u32 2147483647, %v791
        %vm985 = vcmp.eq.f32.partialorder %v984, 8.507059e+37
        %v986 = vand.u32 %v791, 2147483648
        %v987 = vor.u32 1.1754944e-38, %v986
        %v988 = vsel %vm985, %v987, %v983
        %v989 = vmul.f32 1.0, %v988
        %v990 = vrcp.pop %v792
        %v991 = vmul.f32 %v792, %v990
        %v992 = vsub.f32 1.0, %v991
        %v993 = vmul.f32 %v990, %v992
        %v994 = vadd.f32 %v990, %v993
        %vm995 = vweird.f32 %v792
        %vm996 = vweird.f32 %v990
        %vm997 = vmor %vm995, %vm996
        %v998 = vsel %vm997, %v990, %v994
        %v999 = vand.u32 2147483647, %v792
        %vm1000 = vcmp.eq.f32.partialorder %v999, 8.507059e+37
        %v1001 = vand.u32 %v792, 2147483648
        %v1002 = vor.u32 1.1754944e-38, %v1001
        %v1003 = vsel %vm1000, %v1002, %v998
        %v1004 = vmul.f32 1.0, %v1003
        %v1005 = vrcp.pop %v793
        %v1006 = vmul.f32 %v793, %v1005
        %v1007 = vsub.f32 1.0, %v1006
        %v1008 = vmul.f32 %v1005, %v1007
        %v1009 = vadd.f32 %v1005, %v1008
        %vm1010 = vweird.f32 %v793
        %vm1011 = vweird.f32 %v1005
        %vm1012 = vmor %vm1010, %vm1011
        %v1013 = vsel %vm1012, %v1005, %v1009
        %v1014 = vand.u32 2147483647, %v793
        %vm1015 = vcmp.eq.f32.partialorder %v1014, 8.507059e+37
        %v1016 = vand.u32 %v793, 2147483648
        %v1017 = vor.u32 1.1754944e-38, %v1016
        %v1018 = vsel %vm1015, %v1017, %v1013
        %v1019 = vmul.f32 1.0, %v1018
        %v1020 = vrcp.pop %v794
        %v1021 = vmul.f32 %v794, %v1020
        %v1022 = vsub.f32 1.0, %v1021
        %v1023 = vmul.f32 %v1020, %v1022
        %v1024 = vadd.f32 %v1020, %v1023
        %vm1025 = vweird.f32 %v794
        %vm1026 = vweird.f32 %v1020
        %vm1027 = vmor %vm1025, %vm1026
        %v1028 = vsel %vm1027, %v1020, %v1024
        %v1029 = vand.u32 2147483647, %v794
        %vm1030 = vcmp.eq.f32.partialorder %v1029, 8.507059e+37
        %v1031 = vand.u32 %v794, 2147483648
        %v1032 = vor.u32 1.1754944e-38, %v1031
        %v1033 = vsel %vm1030, %v1032, %v1028
        %v1034 = vmul.f32 1.0, %v1033
        %v1035 = vxor.u32 %v692, 2147483648
        %v1036 = vxor.u32 %v694, 2147483648
        %v1037 = vxor.u32 %v697, 2147483648
        %v1038 = vxor.u32 %v699, 2147483648
        %v1039 = vxor.u32 %v702, 2147483648
        %v1040 = vxor.u32 %v704, 2147483648
        %v1041 = vxor.u32 %v707, 2147483648
        %v1042 = vxor.u32 %v709, 2147483648
        %v1043 = vxor.u32 %v712, 2147483648
        %v1044 = vxor.u32 %v714, 2147483648
        %v1045 = vxor.u32 %v717, 2147483648
        %v1046 = vxor.u32 %v719, 2147483648
        %v1047 = vxor.u32 %v722, 2147483648
        %v1048 = vxor.u32 %v724, 2147483648
        %v1049 = vxor.u32 %v727, 2147483648
        %v1050 = vxor.u32 %v729, 2147483648
        %v1051 = vmul.f32 %v1035, 1.442695
        %v1052 = vpow.pop %v1051
        %v1053 = vmul.f32 %v1036, 1.442695
        %v1054 = vpow.pop %v1053
        %v1055 = vmul.f32 %v1037, 1.442695
        %v1056 = vpow.pop %v1055
        %v1057 = vmul.f32 %v1038, 1.442695
        %v1058 = vpow.pop %v1057
        %v1059 = vmul.f32 %v1039, 1.442695
        %v1060 = vpow.pop %v1059
        %v1061 = vmul.f32 %v1040, 1.442695
        %v1062 = vpow.pop %v1061
        %v1063 = vmul.f32 %v1041, 1.442695
        %v1064 = vpow.pop %v1063
        %v1065 = vmul.f32 %v1042, 1.442695
        %v1066 = vpow.pop %v1065
        %v1067 = vmul.f32 %v1043, 1.442695
        %v1068 = vpow.pop %v1067
        %v1069 = vmul.f32 %v1044, 1.442695
        %v1070 = vpow.pop %v1069
        %v1071 = vmul.f32 %v1045, 1.442695
        %v1072 = vpow.pop %v1071
        %v1073 = vmul.f32 %v1046, 1.442695
        %v1074 = vpow.pop %v1073
        %v1075 = vmul.f32 %v1047, 1.442695
        %v1076 = vpow.pop %v1075
        %v1077 = vmul.f32 %v1048, 1.442695
        %v1078 = vpow.pop %v1077
        %v1079 = vmul.f32 %v1049, 1.442695
        %v1080 = vpow.pop %v1079
        %v1081 = vmul.f32 %v1050, 1.442695
        %v1082 = vpow.pop %v1081
        %v1083 = vadd.f32 %v1052, 1.0
        %v1084 = vadd.f32 %v1054, 1.0
        %v1085 = vadd.f32 %v1056, 1.0
        %v1086 = vadd.f32 %v1058, 1.0
        %v1087 = vadd.f32 %v1060, 1.0
        %v1088 = vadd.f32 %v1062, 1.0
        %v1089 = vadd.f32 %v1064, 1.0
        %v1090 = vadd.f32 %v1066, 1.0
        %v1091 = vadd.f32 %v1068, 1.0
        %v1092 = vadd.f32 %v1070, 1.0
        %v1093 = vadd.f32 %v1072, 1.0
        %v1094 = vadd.f32 %v1074, 1.0
        %v1095 = vadd.f32 %v1076, 1.0
        %v1096 = vadd.f32 %v1078, 1.0
        %v1097 = vadd.f32 %v1080, 1.0
        %v1098 = vadd.f32 %v1082, 1.0
        %v1099 = vrcp.pop %v1083
        %v1100 = vmul.f32 %v1083, %v1099
        %v1101 = vsub.f32 1.0, %v1100
        %v1102 = vmul.f32 %v1099, %v1101
        %v1103 = vadd.f32 %v1099, %v1102
        %vm1104 = vweird.f32 %v1083
        %vm1105 = vweird.f32 %v1099
        %vm1106 = vmor %vm1104, %vm1105
        %v1107 = vsel %vm1106, %v1099, %v1103
        %v1108 = vand.u32 2147483647, %v1083
        %vm1109 = vcmp.eq.f32.partialorder %v1108, 8.507059e+37
        %v1110 = vand.u32 %v1083, 2147483648
        %v1111 = vor.u32 1.1754944e-38, %v1110
        %v1112 = vsel %vm1109, %v1111, %v1107
        %v1113 = vmul.f32 1.0, %v1112
        %v1114 = vrcp.pop %v1084
        %v1115 = vmul.f32 %v1084, %v1114
        %v1116 = vsub.f32 1.0, %v1115
        %v1117 = vmul.f32 %v1114, %v1116
        %v1118 = vadd.f32 %v1114, %v1117
        %vm1119 = vweird.f32 %v1084
        %vm1120 = vweird.f32 %v1114
        %vm1121 = vmor %vm1119, %vm1120
        %v1122 = vsel %vm1121, %v1114, %v1118
        %v1123 = vand.u32 2147483647, %v1084
        %vm1124 = vcmp.eq.f32.partialorder %v1123, 8.507059e+37
        %v1125 = vand.u32 %v1084, 2147483648
        %v1126 = vor.u32 1.1754944e-38, %v1125
        %v1127 = vsel %vm1124, %v1126, %v1122
        %v1128 = vmul.f32 1.0, %v1127
        %v1129 = vrcp.pop %v1085
        %v1130 = vmul.f32 %v1085, %v1129
        %v1131 = vsub.f32 1.0, %v1130
        %v1132 = vmul.f32 %v1129, %v1131
        %v1133 = vadd.f32 %v1129, %v1132
        %vm1134 = vweird.f32 %v1085
        %vm1135 = vweird.f32 %v1129
        %vm1136 = vmor %vm1134, %vm1135
        %v1137 = vsel %vm1136, %v1129, %v1133
        %v1138 = vand.u32 2147483647, %v1085
        %vm1139 = vcmp.eq.f32.partialorder %v1138, 8.507059e+37
        %v1140 = vand.u32 %v1085, 2147483648
        %v1141 = vor.u32 1.1754944e-38, %v1140
        %v1142 = vsel %vm1139, %v1141, %v1137
        %v1143 = vmul.f32 1.0, %v1142
        %v1144 = vrcp.pop %v1086
        %v1145 = vmul.f32 %v1086, %v1144
        %v1146 = vsub.f32 1.0, %v1145
        %v1147 = vmul.f32 %v1144, %v1146
        %v1148 = vadd.f32 %v1144, %v1147
        %vm1149 = vweird.f32 %v1086
        %vm1150 = vweird.f32 %v1144
        %vm1151 = vmor %vm1149, %vm1150
        %v1152 = vsel %vm1151, %v1144, %v1148
        %v1153 = vand.u32 2147483647, %v1086
        %vm1154 = vcmp.eq.f32.partialorder %v1153, 8.507059e+37
        %v1155 = vand.u32 %v1086, 2147483648
        %v1156 = vor.u32 1.1754944e-38, %v1155
        %v1157 = vsel %vm1154, %v1156, %v1152
        %v1158 = vmul.f32 1.0, %v1157
        %v1159 = vrcp.pop %v1087
        %v1160 = vmul.f32 %v1087, %v1159
        %v1161 = vsub.f32 1.0, %v1160
        %v1162 = vmul.f32 %v1159, %v1161
        %v1163 = vadd.f32 %v1159, %v1162
        %vm1164 = vweird.f32 %v1087
        %vm1165 = vweird.f32 %v1159
        %vm1166 = vmor %vm1164, %vm1165
        %v1167 = vsel %vm1166, %v1159, %v1163
        %v1168 = vand.u32 2147483647, %v1087
        %vm1169 = vcmp.eq.f32.partialorder %v1168, 8.507059e+37
        %v1170 = vand.u32 %v1087, 2147483648
        %v1171 = vor.u32 1.1754944e-38, %v1170
        %v1172 = vsel %vm1169, %v1171, %v1167
        %v1173 = vmul.f32 1.0, %v1172
        %v1174 = vrcp.pop %v1088
        %v1175 = vmul.f32 %v1088, %v1174
        %v1176 = vsub.f32 1.0, %v1175
        %v1177 = vmul.f32 %v1174, %v1176
        %v1178 = vadd.f32 %v1174, %v1177
        %vm1179 = vweird.f32 %v1088
        %vm1180 = vweird.f32 %v1174
        %vm1181 = vmor %vm1179, %vm1180
        %v1182 = vsel %vm1181, %v1174, %v1178
        %v1183 = vand.u32 2147483647, %v1088
        %vm1184 = vcmp.eq.f32.partialorder %v1183, 8.507059e+37
        %v1185 = vand.u32 %v1088, 2147483648
        %v1186 = vor.u32 1.1754944e-38, %v1185
        %v1187 = vsel %vm1184, %v1186, %v1182
        %v1188 = vmul.f32 1.0, %v1187
        %v1189 = vrcp.pop %v1089
        %v1190 = vmul.f32 %v1089, %v1189
        %v1191 = vsub.f32 1.0, %v1190
        %v1192 = vmul.f32 %v1189, %v1191
        %v1193 = vadd.f32 %v1189, %v1192
        %vm1194 = vweird.f32 %v1089
        %vm1195 = vweird.f32 %v1189
        %vm1196 = vmor %vm1194, %vm1195
        %v1197 = vsel %vm1196, %v1189, %v1193
        %v1198 = vand.u32 2147483647, %v1089
        %vm1199 = vcmp.eq.f32.partialorder %v1198, 8.507059e+37
        %v1200 = vand.u32 %v1089, 2147483648
        %v1201 = vor.u32 1.1754944e-38, %v1200
        %v1202 = vsel %vm1199, %v1201, %v1197
        %v1203 = vmul.f32 1.0, %v1202
        %v1204 = vrcp.pop %v1090
        %v1205 = vmul.f32 %v1090, %v1204
        %v1206 = vsub.f32 1.0, %v1205
        %v1207 = vmul.f32 %v1204, %v1206
        %v1208 = vadd.f32 %v1204, %v1207
        %vm1209 = vweird.f32 %v1090
        %vm1210 = vweird.f32 %v1204
        %vm1211 = vmor %vm1209, %vm1210
        %v1212 = vsel %vm1211, %v1204, %v1208
        %v1213 = vand.u32 2147483647, %v1090
        %vm1214 = vcmp.eq.f32.partialorder %v1213, 8.507059e+37
        %v1215 = vand.u32 %v1090, 2147483648
        %v1216 = vor.u32 1.1754944e-38, %v1215
        %v1217 = vsel %vm1214, %v1216, %v1212
        %v1218 = vmul.f32 1.0, %v1217
        %v1219 = vrcp.pop %v1091
        %v1220 = vmul.f32 %v1091, %v1219
        %v1221 = vsub.f32 1.0, %v1220
        %v1222 = vmul.f32 %v1219, %v1221
        %v1223 = vadd.f32 %v1219, %v1222
        %vm1224 = vweird.f32 %v1091
        %vm1225 = vweird.f32 %v1219
        %vm1226 = vmor %vm1224, %vm1225
        %v1227 = vsel %vm1226, %v1219, %v1223
        %v1228 = vand.u32 2147483647, %v1091
        %vm1229 = vcmp.eq.f32.partialorder %v1228, 8.507059e+37
        %v1230 = vand.u32 %v1091, 2147483648
        %v1231 = vor.u32 1.1754944e-38, %v1230
        %v1232 = vsel %vm1229, %v1231, %v1227
        %v1233 = vmul.f32 1.0, %v1232
        %v1234 = vrcp.pop %v1092
        %v1235 = vmul.f32 %v1092, %v1234
        %v1236 = vsub.f32 1.0, %v1235
        %v1237 = vmul.f32 %v1234, %v1236
        %v1238 = vadd.f32 %v1234, %v1237
        %vm1239 = vweird.f32 %v1092
        %vm1240 = vweird.f32 %v1234
        %vm1241 = vmor %vm1239, %vm1240
        %v1242 = vsel %vm1241, %v1234, %v1238
        %v1243 = vand.u32 2147483647, %v1092
        %vm1244 = vcmp.eq.f32.partialorder %v1243, 8.507059e+37
        %v1245 = vand.u32 %v1092, 2147483648
        %v1246 = vor.u32 1.1754944e-38, %v1245
        %v1247 = vsel %vm1244, %v1246, %v1242
        %v1248 = vmul.f32 1.0, %v1247
        %v1249 = vrcp.pop %v1093
        %v1250 = vmul.f32 %v1093, %v1249
        %v1251 = vsub.f32 1.0, %v1250
        %v1252 = vmul.f32 %v1249, %v1251
        %v1253 = vadd.f32 %v1249, %v1252
        %vm1254 = vweird.f32 %v1093
        %vm1255 = vweird.f32 %v1249
        %vm1256 = vmor %vm1254, %vm1255
        %v1257 = vsel %vm1256, %v1249, %v1253
        %v1258 = vand.u32 2147483647, %v1093
        %vm1259 = vcmp.eq.f32.partialorder %v1258, 8.507059e+37
        %v1260 = vand.u32 %v1093, 2147483648
        %v1261 = vor.u32 1.1754944e-38, %v1260
        %v1262 = vsel %vm1259, %v1261, %v1257
        %v1263 = vmul.f32 1.0, %v1262
        %v1264 = vrcp.pop %v1094
        %v1265 = vmul.f32 %v1094, %v1264
        %v1266 = vsub.f32 1.0, %v1265
        %v1267 = vmul.f32 %v1264, %v1266
        %v1268 = vadd.f32 %v1264, %v1267
        %vm1269 = vweird.f32 %v1094
        %vm1270 = vweird.f32 %v1264
        %vm1271 = vmor %vm1269, %vm1270
        %v1272 = vsel %vm1271, %v1264, %v1268
        %v1273 = vand.u32 2147483647, %v1094
        %vm1274 = vcmp.eq.f32.partialorder %v1273, 8.507059e+37
        %v1275 = vand.u32 %v1094, 2147483648
        %v1276 = vor.u32 1.1754944e-38, %v1275
        %v1277 = vsel %vm1274, %v1276, %v1272
        %v1278 = vmul.f32 1.0, %v1277
        %v1279 = vrcp.pop %v1095
        %v1280 = vmul.f32 %v1095, %v1279
        %v1281 = vsub.f32 1.0, %v1280
        %v1282 = vmul.f32 %v1279, %v1281
        %v1283 = vadd.f32 %v1279, %v1282
        %vm1284 = vweird.f32 %v1095
        %vm1285 = vweird.f32 %v1279
        %vm1286 = vmor %vm1284, %vm1285
        %v1287 = vsel %vm1286, %v1279, %v1283
        %v1288 = vand.u32 2147483647, %v1095
        %vm1289 = vcmp.eq.f32.partialorder %v1288, 8.507059e+37
        %v1290 = vand.u32 %v1095, 2147483648
        %v1291 = vor.u32 1.1754944e-38, %v1290
        %v1292 = vsel %vm1289, %v1291, %v1287
        %v1293 = vmul.f32 1.0, %v1292
        %v1294 = vrcp.pop %v1096
        %v1295 = vmul.f32 %v1096, %v1294
        %v1296 = vsub.f32 1.0, %v1295
        %v1297 = vmul.f32 %v1294, %v1296
        %v1298 = vadd.f32 %v1294, %v1297
        %vm1299 = vweird.f32 %v1096
        %vm1300 = vweird.f32 %v1294
        %vm1301 = vmor %vm1299, %vm1300
        %v1302 = vsel %vm1301, %v1294, %v1298
        %v1303 = vand.u32 2147483647, %v1096
        %vm1304 = vcmp.eq.f32.partialorder %v1303, 8.507059e+37
        %v1305 = vand.u32 %v1096, 2147483648
        %v1306 = vor.u32 1.1754944e-38, %v1305
        %v1307 = vsel %vm1304, %v1306, %v1302
        %v1308 = vmul.f32 1.0, %v1307
        %v1309 = vrcp.pop %v1097
        %v1310 = vmul.f32 %v1097, %v1309
        %v1311 = vsub.f32 1.0, %v1310
        %v1312 = vmul.f32 %v1309, %v1311
        %v1313 = vadd.f32 %v1309, %v1312
        %vm1314 = vweird.f32 %v1097
        %vm1315 = vweird.f32 %v1309
        %vm1316 = vmor %vm1314, %vm1315
        %v1317 = vsel %vm1316, %v1309, %v1313
        %v1318 = vand.u32 2147483647, %v1097
        %vm1319 = vcmp.eq.f32.partialorder %v1318, 8.507059e+37
        %v1320 = vand.u32 %v1097, 2147483648
        %v1321 = vor.u32 1.1754944e-38, %v1320
        %v1322 = vsel %vm1319, %v1321, %v1317
        %v1323 = vmul.f32 1.0, %v1322
        %v1324 = vrcp.pop %v1098
        %v1325 = vmul.f32 %v1098, %v1324
        %v1326 = vsub.f32 1.0, %v1325
        %v1327 = vmul.f32 %v1324, %v1326
        %v1328 = vadd.f32 %v1324, %v1327
        %vm1329 = vweird.f32 %v1098
        %vm1330 = vweird.f32 %v1324
        %vm1331 = vmor %vm1329, %vm1330
        %v1332 = vsel %vm1331, %v1324, %v1328
        %v1333 = vand.u32 2147483647, %v1098
        %vm1334 = vcmp.eq.f32.partialorder %v1333, 8.507059e+37
        %v1335 = vand.u32 %v1098, 2147483648
        %v1336 = vor.u32 1.1754944e-38, %v1335
        %v1337 = vsel %vm1334, %v1336, %v1332
        %v1338 = vmul.f32 1.0, %v1337
        %v1339 = vsub.f32 %v545, %v594
        %v1340 = vsub.f32 %v547, %v596
        %v1341 = vsub.f32 %v550, %v599
        %v1342 = vsub.f32 %v552, %v601
        %v1343 = vsub.f32 %v555, %v604
        %v1344 = vsub.f32 %v557, %v606
        %v1345 = vsub.f32 %v560, %v609
        %v1346 = vsub.f32 %v562, %v611
        %v1347 = vsub.f32 %v565, %v614
        %v1348 = vsub.f32 %v567, %v616
        %v1349 = vsub.f32 %v570, %v619
        %v1350 = vsub.f32 %v572, %v621
        %v1351 = vsub.f32 %v575, %v624
        %v1352 = vsub.f32 %v577, %v626
        %v1353 = vsub.f32 %v580, %v629
        %v1354 = vsub.f32 %v582, %v631
        %v1355 = vand.u32 2147483647, %v1339
        %v1356 = vand.u32 2147483647, %v1340
        %v1357 = vand.u32 2147483647, %v1341
        %v1358 = vand.u32 2147483647, %v1342
        %v1359 = vand.u32 2147483647, %v1343
        %v1360 = vand.u32 2147483647, %v1344
        %v1361 = vand.u32 2147483647, %v1345
        %v1362 = vand.u32 2147483647, %v1346
        %v1363 = vand.u32 2147483647, %v1347
        %v1364 = vand.u32 2147483647, %v1348
        %v1365 = vand.u32 2147483647, %v1349
        %v1366 = vand.u32 2147483647, %v1350
        %v1367 = vand.u32 2147483647, %v1351
        %v1368 = vand.u32 2147483647, %v1352
        %v1369 = vand.u32 2147483647, %v1353
        %v1370 = vand.u32 2147483647, %v1354
        %v1371 = vmul.f32 %v1355, -5.0
        %v1372 = vmul.f32 %v1356, -5.0
        %v1373 = vmul.f32 %v1357, -5.0
        %v1374 = vmul.f32 %v1358, -5.0
        %v1375 = vmul.f32 %v1359, -5.0
        %v1376 = vmul.f32 %v1360, -5.0
        %v1377 = vmul.f32 %v1361, -5.0
        %v1378 = vmul.f32 %v1362, -5.0
        %v1379 = vmul.f32 %v1363, -5.0
        %v1380 = vmul.f32 %v1364, -5.0
        %v1381 = vmul.f32 %v1365, -5.0
        %v1382 = vmul.f32 %v1366, -5.0
        %v1383 = vmul.f32 %v1367, -5.0
        %v1384 = vmul.f32 %v1368, -5.0
        %v1385 = vmul.f32 %v1369, -5.0
        %v1386 = vmul.f32 %v1370, -5.0
        %v1387 = vmul.f32 %v1371, 1.442695
        %v1388 = vpow.pop %v1387
        %v1389 = vmul.f32 %v1372, 1.442695
        %v1390 = vpow.pop %v1389
        %v1391 = vmul.f32 %v1373, 1.442695
        %v1392 = vpow.pop %v1391
        %v1393 = vmul.f32 %v1374, 1.442695
        %v1394 = vpow.pop %v1393
        %v1395 = vmul.f32 %v1375, 1.442695
        %v1396 = vpow.pop %v1395
        %v1397 = vmul.f32 %v1376, 1.442695
        %v1398 = vpow.pop %v1397
        %v1399 = vmul.f32 %v1377, 1.442695
        %v1400 = vpow.pop %v1399
        %v1401 = vmul.f32 %v1378, 1.442695
        %v1402 = vpow.pop %v1401
        %v1403 = vmul.f32 %v1379, 1.442695
        %v1404 = vpow.pop %v1403
        %v1405 = vmul.f32 %v1380, 1.442695
        %v1406 = vpow.pop %v1405
        %v1407 = vmul.f32 %v1381, 1.442695
        %v1408 = vpow.pop %v1407
        %v1409 = vmul.f32 %v1382, 1.442695
        %v1410 = vpow.pop %v1409
        %v1411 = vmul.f32 %v1383, 1.442695
        %v1412 = vpow.pop %v1411
        %v1413 = vmul.f32 %v1384, 1.442695
        %v1414 = vpow.pop %v1413
        %v1415 = vmul.f32 %v1385, 1.442695
        %v1416 = vpow.pop %v1415
        %v1417 = vmul.f32 %v1386, 1.442695
        %v1418 = vpow.pop %v1417
        %v1419 = vadd.f32 %v1388, 1.0
        %v1420 = vlog2.pop %v1419
        %v1421 = vmul.f32 %v1420, 0.6931472
        %v1422 = vmul.f32 -0.5, %v1388
        %v1423 = vadd.f32 %v1422, 1.0
        %v1424 = vmul.f32 %v1423, %v1388
        %v1425 = vand.u32 2147483647, %v1388
        %vm1426 = vcmp.lt.f32.partialorder %v1425, 0.0004427343
        %v1427 = vsel %vm1426, %v1424, %v1421
        %v1428 = vadd.f32 %v1390, 1.0
        %v1429 = vlog2.pop %v1428
        %v1430 = vmul.f32 %v1429, 0.6931472
        %v1431 = vmul.f32 -0.5, %v1390
        %v1432 = vadd.f32 %v1431, 1.0
        %v1433 = vmul.f32 %v1432, %v1390
        %v1434 = vand.u32 2147483647, %v1390
        %vm1435 = vcmp.lt.f32.partialorder %v1434, 0.0004427343
        %v1436 = vsel %vm1435, %v1433, %v1430
        %v1437 = vadd.f32 %v1392, 1.0
        %v1438 = vlog2.pop %v1437
        %v1439 = vmul.f32 %v1438, 0.6931472
        %v1440 = vmul.f32 -0.5, %v1392
        %v1441 = vadd.f32 %v1440, 1.0
        %v1442 = vmul.f32 %v1441, %v1392
        %v1443 = vand.u32 2147483647, %v1392
        %vm1444 = vcmp.lt.f32.partialorder %v1443, 0.0004427343
        %v1445 = vsel %vm1444, %v1442, %v1439
        %v1446 = vadd.f32 %v1394, 1.0
        %v1447 = vlog2.pop %v1446
        %v1448 = vmul.f32 %v1447, 0.6931472
        %v1449 = vmul.f32 -0.5, %v1394
        %v1450 = vadd.f32 %v1449, 1.0
        %v1451 = vmul.f32 %v1450, %v1394
        %v1452 = vand.u32 2147483647, %v1394
        %vm1453 = vcmp.lt.f32.partialorder %v1452, 0.0004427343
        %v1454 = vsel %vm1453, %v1451, %v1448
        %v1455 = vadd.f32 %v1396, 1.0
        %v1456 = vlog2.pop %v1455
        %v1457 = vmul.f32 %v1456, 0.6931472
        %v1458 = vmul.f32 -0.5, %v1396
        %v1459 = vadd.f32 %v1458, 1.0
        %v1460 = vmul.f32 %v1459, %v1396
        %v1461 = vand.u32 2147483647, %v1396
        %vm1462 = vcmp.lt.f32.partialorder %v1461, 0.0004427343
        %v1463 = vsel %vm1462, %v1460, %v1457
        %v1464 = vadd.f32 %v1398, 1.0
        %v1465 = vlog2.pop %v1464
        %v1466 = vmul.f32 %v1465, 0.6931472
        %v1467 = vmul.f32 -0.5, %v1398
        %v1468 = vadd.f32 %v1467, 1.0
        %v1469 = vmul.f32 %v1468, %v1398
        %v1470 = vand.u32 2147483647, %v1398
        %vm1471 = vcmp.lt.f32.partialorder %v1470, 0.0004427343
        %v1472 = vsel %vm1471, %v1469, %v1466
        %v1473 = vadd.f32 %v1400, 1.0
        %v1474 = vlog2.pop %v1473
        %v1475 = vmul.f32 %v1474, 0.6931472
        %v1476 = vmul.f32 -0.5, %v1400
        %v1477 = vadd.f32 %v1476, 1.0
        %v1478 = vmul.f32 %v1477, %v1400
        %v1479 = vand.u32 2147483647, %v1400
        %vm1480 = vcmp.lt.f32.partialorder %v1479, 0.0004427343
        %v1481 = vsel %vm1480, %v1478, %v1475
        %v1482 = vadd.f32 %v1402, 1.0
        %v1483 = vlog2.pop %v1482
        %v1484 = vmul.f32 %v1483, 0.6931472
        %v1485 = vmul.f32 -0.5, %v1402
        %v1486 = vadd.f32 %v1485, 1.0
        %v1487 = vmul.f32 %v1486, %v1402
        %v1488 = vand.u32 2147483647, %v1402
        %vm1489 = vcmp.lt.f32.partialorder %v1488, 0.0004427343
        %v1490 = vsel %vm1489, %v1487, %v1484
        %v1491 = vadd.f32 %v1404, 1.0
        %v1492 = vlog2.pop %v1491
        %v1493 = vmul.f32 %v1492, 0.6931472
        %v1494 = vmul.f32 -0.5, %v1404
        %v1495 = vadd.f32 %v1494, 1.0
        %v1496 = vmul.f32 %v1495, %v1404
        %v1497 = vand.u32 2147483647, %v1404
        %vm1498 = vcmp.lt.f32.partialorder %v1497, 0.0004427343
        %v1499 = vsel %vm1498, %v1496, %v1493
        %v1500 = vadd.f32 %v1406, 1.0
        %v1501 = vlog2.pop %v1500
        %v1502 = vmul.f32 %v1501, 0.6931472
        %v1503 = vmul.f32 -0.5, %v1406
        %v1504 = vadd.f32 %v1503, 1.0
        %v1505 = vmul.f32 %v1504, %v1406
        %v1506 = vand.u32 2147483647, %v1406
        %vm1507 = vcmp.lt.f32.partialorder %v1506, 0.0004427343
        %v1508 = vsel %vm1507, %v1505, %v1502
        %v1509 = vadd.f32 %v1408, 1.0
        %v1510 = vlog2.pop %v1509
        %v1511 = vmul.f32 %v1510, 0.6931472
        %v1512 = vmul.f32 -0.5, %v1408
        %v1513 = vadd.f32 %v1512, 1.0
        %v1514 = vmul.f32 %v1513, %v1408
        %v1515 = vand.u32 2147483647, %v1408
        %vm1516 = vcmp.lt.f32.partialorder %v1515, 0.0004427343
        %v1517 = vsel %vm1516, %v1514, %v1511
        %v1518 = vadd.f32 %v1410, 1.0
        %v1519 = vlog2.pop %v1518
        %v1520 = vmul.f32 %v1519, 0.6931472
        %v1521 = vmul.f32 -0.5, %v1410
        %v1522 = vadd.f32 %v1521, 1.0
        %v1523 = vmul.f32 %v1522, %v1410
        %v1524 = vand.u32 2147483647, %v1410
        %vm1525 = vcmp.lt.f32.partialorder %v1524, 0.0004427343
        %v1526 = vsel %vm1525, %v1523, %v1520
        %v1527 = vadd.f32 %v1412, 1.0
        %v1528 = vlog2.pop %v1527
        %v1529 = vmul.f32 %v1528, 0.6931472
        %v1530 = vmul.f32 -0.5, %v1412
        %v1531 = vadd.f32 %v1530, 1.0
        %v1532 = vmul.f32 %v1531, %v1412
        %v1533 = vand.u32 2147483647, %v1412
        %vm1534 = vcmp.lt.f32.partialorder %v1533, 0.0004427343
        %v1535 = vsel %vm1534, %v1532, %v1529
        %v1536 = vadd.f32 %v1414, 1.0
        %v1537 = vlog2.pop %v1536
        %v1538 = vmul.f32 %v1537, 0.6931472
        %v1539 = vmul.f32 -0.5, %v1414
        %v1540 = vadd.f32 %v1539, 1.0
        %v1541 = vmul.f32 %v1540, %v1414
        %v1542 = vand.u32 2147483647, %v1414
        %vm1543 = vcmp.lt.f32.partialorder %v1542, 0.0004427343
        %v1544 = vsel %vm1543, %v1541, %v1538
        %v1545 = vadd.f32 %v1416, 1.0
        %v1546 = vlog2.pop %v1545
        %v1547 = vmul.f32 %v1546, 0.6931472
        %v1548 = vmul.f32 -0.5, %v1416
        %v1549 = vadd.f32 %v1548, 1.0
        %v1550 = vmul.f32 %v1549, %v1416
        %v1551 = vand.u32 2147483647, %v1416
        %vm1552 = vcmp.lt.f32.partialorder %v1551, 0.0004427343
        %v1553 = vsel %vm1552, %v1550, %v1547
        %v1554 = vadd.f32 %v1418, 1.0
        %v1555 = vlog2.pop %v1554
        %v1556 = vmul.f32 %v1555, 0.6931472
        %v1557 = vmul.f32 -0.5, %v1418
        %v1558 = vadd.f32 %v1557, 1.0
        %v1559 = vmul.f32 %v1558, %v1418
        %v1560 = vand.u32 2147483647, %v1418
        %vm1561 = vcmp.lt.f32.partialorder %v1560, 0.0004427343
        %v1562 = vsel %vm1561, %v1559, %v1556
        %v1563 = vmax.f32 %v545, %v594
        %v1564 = vmax.f32 %v547, %v596
        %v1565 = vmax.f32 %v550, %v599
        %v1566 = vmax.f32 %v552, %v601
        %v1567 = vmax.f32 %v555, %v604
        %v1568 = vmax.f32 %v557, %v606
        %v1569 = vmax.f32 %v560, %v609
        %v1570 = vmax.f32 %v562, %v611
        %v1571 = vmax.f32 %v565, %v614
        %v1572 = vmax.f32 %v567, %v616
        %v1573 = vmax.f32 %v570, %v619
        %v1574 = vmax.f32 %v572, %v621
        %v1575 = vmax.f32 %v575, %v624
        %v1576 = vmax.f32 %v577, %v626
        %v1577 = vmax.f32 %v580, %v629
        %v1578 = vmax.f32 %v582, %v631
        %v1579 = vmul.f32 %v1427, 0.2
        %v1580 = vmul.f32 %v1436, 0.2
        %v1581 = vmul.f32 %v1445, 0.2
        %v1582 = vmul.f32 %v1454, 0.2
        %v1583 = vmul.f32 %v1463, 0.2
        %v1584 = vmul.f32 %v1472, 0.2
        %v1585 = vmul.f32 %v1481, 0.2
        %v1586 = vmul.f32 %v1490, 0.2
        %v1587 = vmul.f32 %v1499, 0.2
        %v1588 = vmul.f32 %v1508, 0.2
        %v1589 = vmul.f32 %v1517, 0.2
        %v1590 = vmul.f32 %v1526, 0.2
        %v1591 = vmul.f32 %v1535, 0.2
        %v1592 = vmul.f32 %v1544, 0.2
        %v1593 = vmul.f32 %v1553, 0.2
        %v1594 = vmul.f32 %v1562, 0.2
        %v1595 = vadd.f32 %v1563, %v1579
        %v1596 = vadd.f32 %v1564, %v1580
        %v1597 = vadd.f32 %v1565, %v1581
        %v1598 = vadd.f32 %v1566, %v1582
        %v1599 = vadd.f32 %v1567, %v1583
        %v1600 = vadd.f32 %v1568, %v1584
        %v1601 = vadd.f32 %v1569, %v1585
        %v1602 = vadd.f32 %v1570, %v1586
        %v1603 = vadd.f32 %v1571, %v1587
        %v1604 = vadd.f32 %v1572, %v1588
        %v1605 = vadd.f32 %v1573, %v1589
        %v1606 = vadd.f32 %v1574, %v1590
        %v1607 = vadd.f32 %v1575, %v1591
        %v1608 = vadd.f32 %v1576, %v1592
        %v1609 = vadd.f32 %v1577, %v1593
        %v1610 = vadd.f32 %v1578, %v1594
        %v1611 = vmul.f32 %v1427, 0.4
        %v1612 = vmul.f32 %v1436, 0.4
        %v1613 = vmul.f32 %v1445, 0.4
        %v1614 = vmul.f32 %v1454, 0.4
        %v1615 = vmul.f32 %v1463, 0.4
        %v1616 = vmul.f32 %v1472, 0.4
        %v1617 = vmul.f32 %v1481, 0.4
        %v1618 = vmul.f32 %v1490, 0.4
        %v1619 = vmul.f32 %v1499, 0.4
        %v1620 = vmul.f32 %v1508, 0.4
        %v1621 = vmul.f32 %v1517, 0.4
        %v1622 = vmul.f32 %v1526, 0.4
        %v1623 = vmul.f32 %v1535, 0.4
        %v1624 = vmul.f32 %v1544, 0.4
        %v1625 = vmul.f32 %v1553, 0.4
        %v1626 = vmul.f32 %v1562, 0.4
        %v1627 = vadd.f32 %v1355, %v1611
        %v1628 = vadd.f32 %v1356, %v1612
        %v1629 = vadd.f32 %v1357, %v1613
        %v1630 = vadd.f32 %v1358, %v1614
        %v1631 = vadd.f32 %v1359, %v1615
        %v1632 = vadd.f32 %v1360, %v1616
        %v1633 = vadd.f32 %v1361, %v1617
        %v1634 = vadd.f32 %v1362, %v1618
        %v1635 = vadd.f32 %v1363, %v1619
        %v1636 = vadd.f32 %v1364, %v1620
        %v1637 = vadd.f32 %v1365, %v1621
        %v1638 = vadd.f32 %v1366, %v1622
        %v1639 = vadd.f32 %v1367, %v1623
        %v1640 = vadd.f32 %v1368, %v1624
        %v1641 = vadd.f32 %v1369, %v1625
        %v1642 = vadd.f32 %v1370, %v1626
        %v1643 = vmul.f32 %v809, %v1595
        %v1644 = vmul.f32 %v824, %v1596
        %v1645 = vmul.f32 %v839, %v1597
        %v1646 = vmul.f32 %v854, %v1598
        %v1647 = vmul.f32 %v869, %v1599
        %v1648 = vmul.f32 %v884, %v1600
        %v1649 = vmul.f32 %v899, %v1601
        %v1650 = vmul.f32 %v914, %v1602
        %v1651 = vmul.f32 %v929, %v1603
        %v1652 = vmul.f32 %v944, %v1604
        %v1653 = vmul.f32 %v959, %v1605
        %v1654 = vmul.f32 %v974, %v1606
        %v1655 = vmul.f32 %v989, %v1607
        %v1656 = vmul.f32 %v1004, %v1608
        %v1657 = vmul.f32 %v1019, %v1609
        %v1658 = vmul.f32 %v1034, %v1610
        %v1659 = vmul.f32 %v1113, %v1627
        %v1660 = vmul.f32 %v1128, %v1628
        %v1661 = vmul.f32 %v1143, %v1629
        %v1662 = vmul.f32 %v1158, %v1630
        %v1663 = vmul.f32 %v1173, %v1631
        %v1664 = vmul.f32 %v1188, %v1632
        %v1665 = vmul.f32 %v1203, %v1633
        %v1666 = vmul.f32 %v1218, %v1634
        %v1667 = vmul.f32 %v1233, %v1635
        %v1668 = vmul.f32 %v1248, %v1636
        %v1669 = vmul.f32 %v1263, %v1637
        %v1670 = vmul.f32 %v1278, %v1638
        %v1671 = vmul.f32 %v1293, %v1639
        %v1672 = vmul.f32 %v1308, %v1640
        %v1673 = vmul.f32 %v1323, %v1641
        %v1674 = vmul.f32 %v1338, %v1642
        %v1675 = vpack.c.bf16 %v1644, %v1643
        %v1676 = vpack.c.bf16 %v1660, %v1659
        %v1677 = vpack.c.bf16 %v1646, %v1645
        %v1678 = vpack.c.bf16 %v1662, %v1661
        %v1679 = vpack.c.bf16 %v1648, %v1647
        %v1680 = vpack.c.bf16 %v1664, %v1663
        %v1681 = vpack.c.bf16 %v1650, %v1649
        %v1682 = vpack.c.bf16 %v1666, %v1665
        %v1683 = vpack.c.bf16 %v1652, %v1651
        %v1684 = vpack.c.bf16 %v1668, %v1667
        %v1685 = vpack.c.bf16 %v1654, %v1653
        %v1686 = vpack.c.bf16 %v1670, %v1669
        %v1687 = vpack.c.bf16 %v1656, %v1655
        %v1688 = vpack.c.bf16 %v1672, %v1671
        %v1689 = vpack.c.bf16 %v1658, %v1657
        %v1690 = vpack.c.bf16 %v1674, %v1673
        %v1691 = vld [vmem:[#allocation10] sm:$0x1]
        %v1692 = vld [vmem:[#allocation10 + $0x1] sm:$0x1]
        %v1693 = vld [vmem:[#allocation10 + $0x2] sm:$0x1]
        %v1694 = vld [vmem:[#allocation8] sm:$0xf]
        %v1695 = vld [vmem:[#allocation8 + $0x4] sm:$0xf]
        %v1696 = vld [vmem:[#allocation8 + $0x8] sm:$0xf]
        %v1697 = vld [vmem:[#allocation8 + $0xc] sm:$0xf]
        %v1698 = vld [vmem:[#allocation8 + $0x10] sm:$0xf]
        %v1699 = vld [vmem:[#allocation8 + $0x14] sm:$0xf]
        %v1700 = vld [vmem:[#allocation8 + $0x18] sm:$0xf]
        %v1701 = vld [vmem:[#allocation8 + $0x1c] sm:$0xf]
        %v1702 = vld [vmem:[#allocation8 + $0x20] sm:$0xf]
        %v1703 = vld [vmem:[#allocation8 + $0x24] sm:$0xf]
        %v1704 = vld [vmem:[#allocation8 + $0x28] sm:$0xf]
        %v1705 = vld [vmem:[#allocation8 + $0x2c] sm:$0xf]
        %v1706 = vld [vmem:[#allocation8 + $0x30] sm:$0xf]
        %v1707 = vld [vmem:[#allocation8 + $0x34] sm:$0xf]
        %v1708 = vld [vmem:[#allocation8 + $0x38] sm:$0xf]
        %v1709 = vld [vmem:[#allocation8 + $0x3c] sm:$0xf]
        %v1710 = vld [vmem:[#allocation8 + $0x40] sm:$0xf]
        %v1711 = vld [vmem:[#allocation8 + $0x44] sm:$0xf]
        %v1712 = vld [vmem:[#allocation8 + $0x48] sm:$0xf]
        %v1713 = vld [vmem:[#allocation8 + $0x4c] sm:$0xf]
        %v1714 = vld [vmem:[#allocation8 + $0x50] sm:$0xf]
        %v1715 = vld [vmem:[#allocation8 + $0x54] sm:$0xf]
        %v1716 = vld [vmem:[#allocation8 + $0x58] sm:$0xf]
        %v1717 = vld [vmem:[#allocation8 + $0x5c] sm:$0xf]
        %v1718 = vld [vmem:[#allocation8 + $0x60] sm:$0xf]
        %v1719 = vld [vmem:[#allocation8 + $0x64] sm:$0xf]
        %v1720 = vld [vmem:[#allocation8 + $0x68] sm:$0xf]
        %v1721 = vld [vmem:[#allocation8 + $0x6c] sm:$0xf]
        %v1722 = vld [vmem:[#allocation8 + $0x70] sm:$0xf]
        %v1723 = vld [vmem:[#allocation8 + $0x74] sm:$0xf]
        %v1724 = vld [vmem:[#allocation8 + $0x78] sm:$0xf]
        %v1725 = vld [vmem:[#allocation8 + $0x7c] sm:$0xf]
        %v1726 = vperm.slane %v1691, 0
        %v1759 = vunpack.c.l.b16 %v1694
        %v1760 = vunpack.c.l.b16 %v1695
        %v1761 = vunpack.c.l.b16 %v1696
        %v1762 = vunpack.c.l.b16 %v1697
        %v1763 = vunpack.c.l.b16 %v1698
        %v1764 = vunpack.c.l.b16 %v1699
        %v1765 = vunpack.c.l.b16 %v1700
        %v1766 = vunpack.c.l.b16 %v1701
        %v1767 = vunpack.c.l.b16 %v1702
        %v1768 = vunpack.c.l.b16 %v1703
        %v1769 = vunpack.c.l.b16 %v1704
        %v1770 = vunpack.c.l.b16 %v1705
        %v1771 = vunpack.c.l.b16 %v1706
        %v1772 = vunpack.c.l.b16 %v1707
        %v1773 = vunpack.c.l.b16 %v1708
        %v1774 = vunpack.c.l.b16 %v1709
        %v1775 = vunpack.c.l.b16 %v1710
        %v1776 = vunpack.c.l.b16 %v1711
        %v1777 = vunpack.c.l.b16 %v1712
        %v1778 = vunpack.c.l.b16 %v1713
        %v1779 = vunpack.c.l.b16 %v1714
        %v1780 = vunpack.c.l.b16 %v1715
        %v1781 = vunpack.c.l.b16 %v1716
        %v1782 = vunpack.c.l.b16 %v1717
        %v1783 = vunpack.c.l.b16 %v1718
        %v1784 = vunpack.c.l.b16 %v1719
        %v1785 = vunpack.c.l.b16 %v1720
        %v1786 = vunpack.c.l.b16 %v1721
        %v1787 = vunpack.c.l.b16 %v1722
        %v1788 = vunpack.c.l.b16 %v1723
        %v1789 = vunpack.c.l.b16 %v1724
        %v1790 = vunpack.c.l.b16 %v1725
        %v1791 = vpack.c.b16 %v1760, %v1759
        %v1792 = vpack.c.b16 %v1762, %v1761
        %v1793 = vpack.c.b16 %v1764, %v1763
        %v1794 = vpack.c.b16 %v1766, %v1765
        %v1795 = vpack.c.b16 %v1768, %v1767
        %v1796 = vpack.c.b16 %v1770, %v1769
        %v1797 = vpack.c.b16 %v1772, %v1771
        %v1798 = vpack.c.b16 %v1774, %v1773
        %v1799 = vpack.c.b16 %v1776, %v1775
        %v1800 = vpack.c.b16 %v1778, %v1777
        %v1801 = vpack.c.b16 %v1780, %v1779
        %v1802 = vpack.c.b16 %v1782, %v1781
        %v1803 = vpack.c.b16 %v1784, %v1783
        %v1804 = vpack.c.b16 %v1786, %v1785
        %v1805 = vpack.c.b16 %v1788, %v1787
        %v1806 = vpack.c.b16 %v1790, %v1789
        %1823 = vmatpush.bf16.msra.mxu0 %v1798
        %1824 = vmatpush.bf16.msra.mxu0 %v1797
        %1825 = vmatpush.bf16.msra.mxu0 %v1796
        %1826 = vmatpush.bf16.msra.mxu0 %v1795
        %1827 = vmatpush.bf16.msra.mxu0 %v1794
        %1828 = vmatpush.bf16.msra.mxu0 %v1793
        %1829 = vmatpush.bf16.msra.mxu0 %v1792
        %1830 = vmatpush.bf16.msra.mxu0 %v1791
        %1831 = vmatmul.bf16.gmra.mxu0 %v1675
        %v1832 = vpop.f32.mrf.mxu0
        %v1833 = vadd.f32 %v1726, %v1832
        %v1834 = vpop.f32.mrf.mxu0
        %v1835 = vadd.f32 %v1726, %v1834
        %1836 = vmatmul.bf16.gmra.mxu0 %v1677
        %v1837 = vpop.f32.mrf.mxu0
        %v1838 = vadd.f32 %v1726, %v1837
        %v1839 = vpop.f32.mrf.mxu0
        %v1840 = vadd.f32 %v1726, %v1839
        %1841 = vmatmul.bf16.gmra.mxu0 %v1679
        %v1842 = vpop.f32.mrf.mxu0
        %v1843 = vadd.f32 %v1726, %v1842
        %v1844 = vpop.f32.mrf.mxu0
        %v1845 = vadd.f32 %v1726, %v1844
        %1846 = vmatmul.bf16.gmra.mxu0 %v1681
        %v1847 = vpop.f32.mrf.mxu0
        %v1848 = vadd.f32 %v1726, %v1847
        %v1849 = vpop.f32.mrf.mxu0
        %v1850 = vadd.f32 %v1726, %v1849
        %1851 = vmatmul.bf16.gmra.mxu0 %v1683
        %v1852 = vpop.f32.mrf.mxu0
        %v1853 = vadd.f32 %v1726, %v1852
        %v1854 = vpop.f32.mrf.mxu0
        %v1855 = vadd.f32 %v1726, %v1854
        %1856 = vmatmul.bf16.gmra.mxu0 %v1685
        %v1857 = vpop.f32.mrf.mxu0
        %v1858 = vadd.f32 %v1726, %v1857
        %v1859 = vpop.f32.mrf.mxu0
        %v1860 = vadd.f32 %v1726, %v1859
        %1861 = vmatmul.bf16.gmra.mxu0 %v1687
        %v1862 = vpop.f32.mrf.mxu0
        %v1863 = vadd.f32 %v1726, %v1862
        %v1864 = vpop.f32.mrf.mxu0
        %v1865 = vadd.f32 %v1726, %v1864
        %1866 = vmatmul.bf16.gmra.mxu0 %v1689
        %v1867 = vpop.f32.mrf.mxu0
        %v1868 = vadd.f32 %v1726, %v1867
        %v1869 = vpop.f32.mrf.mxu0
        %v1870 = vadd.f32 %v1726, %v1869
        %1871 = vdwg.mxu0
        %1872 = vmatpush.bf16.msra.mxu0 %v1806
        %1873 = vmatpush.bf16.msra.mxu0 %v1805
        %1874 = vmatpush.bf16.msra.mxu0 %v1804
        %1875 = vmatpush.bf16.msra.mxu0 %v1803
        %1876 = vmatpush.bf16.msra.mxu0 %v1802
        %1877 = vmatpush.bf16.msra.mxu0 %v1801
        %1878 = vmatpush.bf16.msra.mxu0 %v1800
        %1879 = vmatpush.bf16.msra.mxu0 %v1799
        %1880 = vmatmul.bf16.gmra.mxu0 %v1676
        %v1881 = vpop.f32.mrf.mxu0
        %v1882 = vadd.f32 %v1833, %v1881
        %v1883 = vpop.f32.mrf.mxu0
        %v1884 = vadd.f32 %v1835, %v1883
        %1885 = vmatmul.bf16.gmra.mxu0 %v1678
        %v1886 = vpop.f32.mrf.mxu0
        %v1887 = vadd.f32 %v1838, %v1886
        %v1888 = vpop.f32.mrf.mxu0
        %v1889 = vadd.f32 %v1840, %v1888
        %1890 = vmatmul.bf16.gmra.mxu0 %v1680
        %v1891 = vpop.f32.mrf.mxu0
        %v1892 = vadd.f32 %v1843, %v1891
        %v1893 = vpop.f32.mrf.mxu0
        %v1894 = vadd.f32 %v1845, %v1893
        %1895 = vmatmul.bf16.gmra.mxu0 %v1682
        %v1896 = vpop.f32.mrf.mxu0
        %v1897 = vadd.f32 %v1848, %v1896
        %v1898 = vpop.f32.mrf.mxu0
        %v1899 = vadd.f32 %v1850, %v1898
        %1900 = vmatmul.bf16.gmra.mxu0 %v1684
        %v1901 = vpop.f32.mrf.mxu0
        %v1902 = vadd.f32 %v1853, %v1901
        %v1903 = vpop.f32.mrf.mxu0
        %v1904 = vadd.f32 %v1855, %v1903
        %1905 = vmatmul.bf16.gmra.mxu0 %v1686
        %v1906 = vpop.f32.mrf.mxu0
        %v1907 = vadd.f32 %v1858, %v1906
        %v1908 = vpop.f32.mrf.mxu0
        %v1909 = vadd.f32 %v1860, %v1908
        %1910 = vmatmul.bf16.gmra.mxu0 %v1688
        %v1911 = vpop.f32.mrf.mxu0
        %v1912 = vadd.f32 %v1863, %v1911
        %v1913 = vpop.f32.mrf.mxu0
        %v1914 = vadd.f32 %v1865, %v1913
        %1915 = vmatmul.bf16.gmra.mxu0 %v1690
        %v1916 = vpop.f32.mrf.mxu0
        %v1917 = vadd.f32 %v1868, %v1916
        %v1918 = vpop.f32.mrf.mxu0
        %v1919 = vadd.f32 %v1870, %v1918
        %1920 = vdwg.mxu0
        %v1921 = vadd.f32 %v309, %v1882
        %v1922 = vadd.f32 %v310, %v1884
        %v1923 = vadd.f32 %v311, %v1887
        %v1924 = vadd.f32 %v312, %v1889
        %v1925 = vadd.f32 %v313, %v1892
        %v1926 = vadd.f32 %v314, %v1894
        %v1927 = vadd.f32 %v315, %v1897
        %v1928 = vadd.f32 %v316, %v1899
        %v1929 = vadd.f32 %v317, %v1902
        %v1930 = vadd.f32 %v318, %v1904
        %v1931 = vadd.f32 %v319, %v1907
        %v1932 = vadd.f32 %v320, %v1909
        %v1933 = vadd.f32 %v321, %v1912
        %v1934 = vadd.f32 %v322, %v1914
        %v1935 = vadd.f32 %v323, %v1917
        %v1936 = vadd.f32 %v324, %v1919
        %1937 = vadd.xlane.f32.xlu0 %v1921
        %v1938 = vpop.xlane.xlu0 %1937
        %1939 = vadd.xlane.f32.xlu0 %v1922
        %v1940 = vpop.xlane.xlu0 %1939
        %1941 = vadd.xlane.f32.xlu0 %v1923
        %v1942 = vpop.xlane.xlu0 %1941
        %1943 = vadd.xlane.f32.xlu0 %v1924
        %v1944 = vpop.xlane.xlu0 %1943
        %1945 = vadd.xlane.f32.xlu0 %v1925
        %v1946 = vpop.xlane.xlu0 %1945
        %1947 = vadd.xlane.f32.xlu0 %v1926
        %v1948 = vpop.xlane.xlu0 %1947
        %1949 = vadd.xlane.f32.xlu0 %v1927
        %v1950 = vpop.xlane.xlu0 %1949
        %1951 = vadd.xlane.f32.xlu0 %v1928
        %v1952 = vpop.xlane.xlu0 %1951
        %1953 = vadd.xlane.f32.xlu0 %v1929
        %v1954 = vpop.xlane.xlu0 %1953
        %1955 = vadd.xlane.f32.xlu0 %v1930
        %v1956 = vpop.xlane.xlu0 %1955
        %1957 = vadd.xlane.f32.xlu0 %v1931
        %v1958 = vpop.xlane.xlu0 %1957
        %1959 = vadd.xlane.f32.xlu0 %v1932
        %v1960 = vpop.xlane.xlu0 %1959
        %1961 = vadd.xlane.f32.xlu0 %v1933
        %v1962 = vpop.xlane.xlu0 %1961
        %1963 = vadd.xlane.f32.xlu0 %v1934
        %v1964 = vpop.xlane.xlu0 %1963
        %1965 = vadd.xlane.f32.xlu0 %v1935
        %v1966 = vpop.xlane.xlu0 %1965
        %1967 = vadd.xlane.f32.xlu0 %v1936
        %v1968 = vpop.xlane.xlu0 %1967
        %v1969 = vmul.f32 %v1921, %v1921
        %v1970 = vmul.f32 %v1922, %v1922
        %v1971 = vmul.f32 %v1923, %v1923
        %v1972 = vmul.f32 %v1924, %v1924
        %v1973 = vmul.f32 %v1925, %v1925
        %v1974 = vmul.f32 %v1926, %v1926
        %v1975 = vmul.f32 %v1927, %v1927
        %v1976 = vmul.f32 %v1928, %v1928
        %v1977 = vmul.f32 %v1929, %v1929
        %v1978 = vmul.f32 %v1930, %v1930
        %v1979 = vmul.f32 %v1931, %v1931
        %v1980 = vmul.f32 %v1932, %v1932
        %v1981 = vmul.f32 %v1933, %v1933
        %v1982 = vmul.f32 %v1934, %v1934
        %v1983 = vmul.f32 %v1935, %v1935
        %v1984 = vmul.f32 %v1936, %v1936
        %1985 = vadd.xlane.f32.xlu0 %v1969
        %v1986 = vpop.xlane.xlu0 %1985
        %1987 = vadd.xlane.f32.xlu0 %v1970
        %v1988 = vpop.xlane.xlu0 %1987
        %1989 = vadd.xlane.f32.xlu0 %v1971
        %v1990 = vpop.xlane.xlu0 %1989
        %1991 = vadd.xlane.f32.xlu0 %v1972
        %v1992 = vpop.xlane.xlu0 %1991
        %1993 = vadd.xlane.f32.xlu0 %v1973
        %v1994 = vpop.xlane.xlu0 %1993
        %1995 = vadd.xlane.f32.xlu0 %v1974
        %v1996 = vpop.xlane.xlu0 %1995
        %1997 = vadd.xlane.f32.xlu0 %v1975
        %v1998 = vpop.xlane.xlu0 %1997
        %1999 = vadd.xlane.f32.xlu0 %v1976
        %v2000 = vpop.xlane.xlu0 %1999
        %2001 = vadd.xlane.f32.xlu0 %v1977
        %v2002 = vpop.xlane.xlu0 %2001
        %2003 = vadd.xlane.f32.xlu0 %v1978
        %v2004 = vpop.xlane.xlu0 %2003
        %2005 = vadd.xlane.f32.xlu0 %v1979
        %v2006 = vpop.xlane.xlu0 %2005
        %2007 = vadd.xlane.f32.xlu0 %v1980
        %v2008 = vpop.xlane.xlu0 %2007
        %2009 = vadd.xlane.f32.xlu0 %v1981
        %v2010 = vpop.xlane.xlu0 %2009
        %2011 = vadd.xlane.f32.xlu0 %v1982
        %v2012 = vpop.xlane.xlu0 %2011
        %2013 = vadd.xlane.f32.xlu0 %v1983
        %v2014 = vpop.xlane.xlu0 %2013
        %2015 = vadd.xlane.f32.xlu0 %v1984
        %v2016 = vpop.xlane.xlu0 %2015
        %v2017 = vmul.f32 %v1938, 0.0078125
        %v2018 = vmul.f32 %v1940, 0.0078125
        %v2019 = vmul.f32 %v1942, 0.0078125
        %v2020 = vmul.f32 %v1944, 0.0078125
        %v2021 = vmul.f32 %v1946, 0.0078125
        %v2022 = vmul.f32 %v1948, 0.0078125
        %v2023 = vmul.f32 %v1950, 0.0078125
        %v2024 = vmul.f32 %v1952, 0.0078125
        %v2025 = vmul.f32 %v1954, 0.0078125
        %v2026 = vmul.f32 %v1956, 0.0078125
        %v2027 = vmul.f32 %v1958, 0.0078125
        %v2028 = vmul.f32 %v1960, 0.0078125
        %v2029 = vmul.f32 %v1962, 0.0078125
        %v2030 = vmul.f32 %v1964, 0.0078125
        %v2031 = vmul.f32 %v1966, 0.0078125
        %v2032 = vmul.f32 %v1968, 0.0078125
        %v2033 = vmul.f32 %v1986, 0.0078125
        %v2034 = vmul.f32 %v1988, 0.0078125
        %v2035 = vmul.f32 %v1990, 0.0078125
        %v2036 = vmul.f32 %v1992, 0.0078125
        %v2037 = vmul.f32 %v1994, 0.0078125
        %v2038 = vmul.f32 %v1996, 0.0078125
        %v2039 = vmul.f32 %v1998, 0.0078125
        %v2040 = vmul.f32 %v2000, 0.0078125
        %v2041 = vmul.f32 %v2002, 0.0078125
        %v2042 = vmul.f32 %v2004, 0.0078125
        %v2043 = vmul.f32 %v2006, 0.0078125
        %v2044 = vmul.f32 %v2008, 0.0078125
        %v2045 = vmul.f32 %v2010, 0.0078125
        %v2046 = vmul.f32 %v2012, 0.0078125
        %v2047 = vmul.f32 %v2014, 0.0078125
        %v2048 = vmul.f32 %v2016, 0.0078125
        %v2049 = vmul.f32 %v2017, %v2017
        %v2050 = vmul.f32 %v2018, %v2018
        %v2051 = vmul.f32 %v2019, %v2019
        %v2052 = vmul.f32 %v2020, %v2020
        %v2053 = vmul.f32 %v2021, %v2021
        %v2054 = vmul.f32 %v2022, %v2022
        %v2055 = vmul.f32 %v2023, %v2023
        %v2056 = vmul.f32 %v2024, %v2024
        %v2057 = vmul.f32 %v2025, %v2025
        %v2058 = vmul.f32 %v2026, %v2026
        %v2059 = vmul.f32 %v2027, %v2027
        %v2060 = vmul.f32 %v2028, %v2028
        %v2061 = vmul.f32 %v2029, %v2029
        %v2062 = vmul.f32 %v2030, %v2030
        %v2063 = vmul.f32 %v2031, %v2031
        %v2064 = vmul.f32 %v2032, %v2032
        %v2065 = vsub.f32 %v2033, %v2049
        %v2066 = vsub.f32 %v2034, %v2050
        %v2067 = vsub.f32 %v2035, %v2051
        %v2068 = vsub.f32 %v2036, %v2052
        %v2069 = vsub.f32 %v2037, %v2053
        %v2070 = vsub.f32 %v2038, %v2054
        %v2071 = vsub.f32 %v2039, %v2055
        %v2072 = vsub.f32 %v2040, %v2056
        %v2073 = vsub.f32 %v2041, %v2057
        %v2074 = vsub.f32 %v2042, %v2058
        %v2075 = vsub.f32 %v2043, %v2059
        %v2076 = vsub.f32 %v2044, %v2060
        %v2077 = vsub.f32 %v2045, %v2061
        %v2078 = vsub.f32 %v2046, %v2062
        %v2079 = vsub.f32 %v2047, %v2063
        %v2080 = vsub.f32 %v2048, %v2064
        %v2081 = vsub.f32 %v1921, %v2017
        %v2082 = vsub.f32 %v1922, %v2018
        %v2083 = vsub.f32 %v1923, %v2019
        %v2084 = vsub.f32 %v1924, %v2020
        %v2085 = vsub.f32 %v1925, %v2021
        %v2086 = vsub.f32 %v1926, %v2022
        %v2087 = vsub.f32 %v1927, %v2023
        %v2088 = vsub.f32 %v1928, %v2024
        %v2089 = vsub.f32 %v1929, %v2025
        %v2090 = vsub.f32 %v1930, %v2026
        %v2091 = vsub.f32 %v1931, %v2027
        %v2092 = vsub.f32 %v1932, %v2028
        %v2093 = vsub.f32 %v1933, %v2029
        %v2094 = vsub.f32 %v1934, %v2030
        %v2095 = vsub.f32 %v1935, %v2031
        %v2096 = vsub.f32 %v1936, %v2032
        %v2097 = vadd.f32 %v2065, 1e-05
        %v2098 = vadd.f32 %v2066, 1e-05
        %v2099 = vadd.f32 %v2067, 1e-05
        %v2100 = vadd.f32 %v2068, 1e-05
        %v2101 = vadd.f32 %v2069, 1e-05
        %v2102 = vadd.f32 %v2070, 1e-05
        %v2103 = vadd.f32 %v2071, 1e-05
        %v2104 = vadd.f32 %v2072, 1e-05
        %v2105 = vadd.f32 %v2073, 1e-05
        %v2106 = vadd.f32 %v2074, 1e-05
        %v2107 = vadd.f32 %v2075, 1e-05
        %v2108 = vadd.f32 %v2076, 1e-05
        %v2109 = vadd.f32 %v2077, 1e-05
        %v2110 = vadd.f32 %v2078, 1e-05
        %v2111 = vadd.f32 %v2079, 1e-05
        %v2112 = vadd.f32 %v2080, 1e-05
        %v2113 = vrsqrt.pop %v2097
        %v2114 = vmul.f32 %v2113, %v2097
        %v2115 = vmul.f32 %v2114, %v2113
        %v2116 = vmul.f32 0.5, %v2115
        %v2117 = vsub.f32 1.5, %v2116
        %v2118 = vmul.f32 %v2113, %v2117
        %vm2119 = vweird.f32 %v2097
        %vm2120 = vweird.f32 %v2113
        %vm2121 = vmor %vm2119, %vm2120
        %v2122 = vsel %vm2121, %v2113, %v2118
        %v2123 = vrsqrt.pop %v2098
        %v2124 = vmul.f32 %v2123, %v2098
        %v2125 = vmul.f32 %v2124, %v2123
        %v2126 = vmul.f32 0.5, %v2125
        %v2127 = vsub.f32 1.5, %v2126
        %v2128 = vmul.f32 %v2123, %v2127
        %vm2129 = vweird.f32 %v2098
        %vm2130 = vweird.f32 %v2123
        %vm2131 = vmor %vm2129, %vm2130
        %v2132 = vsel %vm2131, %v2123, %v2128
        %v2133 = vrsqrt.pop %v2099
        %v2134 = vmul.f32 %v2133, %v2099
        %v2135 = vmul.f32 %v2134, %v2133
        %v2136 = vmul.f32 0.5, %v2135
        %v2137 = vsub.f32 1.5, %v2136
        %v2138 = vmul.f32 %v2133, %v2137
        %vm2139 = vweird.f32 %v2099
        %vm2140 = vweird.f32 %v2133
        %vm2141 = vmor %vm2139, %vm2140
        %v2142 = vsel %vm2141, %v2133, %v2138
        %v2143 = vrsqrt.pop %v2100
        %v2144 = vmul.f32 %v2143, %v2100
        %v2145 = vmul.f32 %v2144, %v2143
        %v2146 = vmul.f32 0.5, %v2145
        %v2147 = vsub.f32 1.5, %v2146
        %v2148 = vmul.f32 %v2143, %v2147
        %vm2149 = vweird.f32 %v2100
        %vm2150 = vweird.f32 %v2143
        %vm2151 = vmor %vm2149, %vm2150
        %v2152 = vsel %vm2151, %v2143, %v2148
        %v2153 = vrsqrt.pop %v2101
        %v2154 = vmul.f32 %v2153, %v2101
        %v2155 = vmul.f32 %v2154, %v2153
        %v2156 = vmul.f32 0.5, %v2155
        %v2157 = vsub.f32 1.5, %v2156
        %v2158 = vmul.f32 %v2153, %v2157
        %vm2159 = vweird.f32 %v2101
        %vm2160 = vweird.f32 %v2153
        %vm2161 = vmor %vm2159, %vm2160
        %v2162 = vsel %vm2161, %v2153, %v2158
        %v2163 = vrsqrt.pop %v2102
        %v2164 = vmul.f32 %v2163, %v2102
        %v2165 = vmul.f32 %v2164, %v2163
        %v2166 = vmul.f32 0.5, %v2165
        %v2167 = vsub.f32 1.5, %v2166
        %v2168 = vmul.f32 %v2163, %v2167
        %vm2169 = vweird.f32 %v2102
        %vm2170 = vweird.f32 %v2163
        %vm2171 = vmor %vm2169, %vm2170
        %v2172 = vsel %vm2171, %v2163, %v2168
        %v2173 = vrsqrt.pop %v2103
        %v2174 = vmul.f32 %v2173, %v2103
        %v2175 = vmul.f32 %v2174, %v2173
        %v2176 = vmul.f32 0.5, %v2175
        %v2177 = vsub.f32 1.5, %v2176
        %v2178 = vmul.f32 %v2173, %v2177
        %vm2179 = vweird.f32 %v2103
        %vm2180 = vweird.f32 %v2173
        %vm2181 = vmor %vm2179, %vm2180
        %v2182 = vsel %vm2181, %v2173, %v2178
        %v2183 = vrsqrt.pop %v2104
        %v2184 = vmul.f32 %v2183, %v2104
        %v2185 = vmul.f32 %v2184, %v2183
        %v2186 = vmul.f32 0.5, %v2185
        %v2187 = vsub.f32 1.5, %v2186
        %v2188 = vmul.f32 %v2183, %v2187
        %vm2189 = vweird.f32 %v2104
        %vm2190 = vweird.f32 %v2183
        %vm2191 = vmor %vm2189, %vm2190
        %v2192 = vsel %vm2191, %v2183, %v2188
        %v2193 = vrsqrt.pop %v2105
        %v2194 = vmul.f32 %v2193, %v2105
        %v2195 = vmul.f32 %v2194, %v2193
        %v2196 = vmul.f32 0.5, %v2195
        %v2197 = vsub.f32 1.5, %v2196
        %v2198 = vmul.f32 %v2193, %v2197
        %vm2199 = vweird.f32 %v2105
        %vm2200 = vweird.f32 %v2193
        %vm2201 = vmor %vm2199, %vm2200
        %v2202 = vsel %vm2201, %v2193, %v2198
        %v2203 = vrsqrt.pop %v2106
        %v2204 = vmul.f32 %v2203, %v2106
        %v2205 = vmul.f32 %v2204, %v2203
        %v2206 = vmul.f32 0.5, %v2205
        %v2207 = vsub.f32 1.5, %v2206
        %v2208 = vmul.f32 %v2203, %v2207
        %vm2209 = vweird.f32 %v2106
        %vm2210 = vweird.f32 %v2203
        %vm2211 = vmor %vm2209, %vm2210
        %v2212 = vsel %vm2211, %v2203, %v2208
        %v2213 = vrsqrt.pop %v2107
        %v2214 = vmul.f32 %v2213, %v2107
        %v2215 = vmul.f32 %v2214, %v2213
        %v2216 = vmul.f32 0.5, %v2215
        %v2217 = vsub.f32 1.5, %v2216
        %v2218 = vmul.f32 %v2213, %v2217
        %vm2219 = vweird.f32 %v2107
        %vm2220 = vweird.f32 %v2213
        %vm2221 = vmor %vm2219, %vm2220
        %v2222 = vsel %vm2221, %v2213, %v2218
        %v2223 = vrsqrt.pop %v2108
        %v2224 = vmul.f32 %v2223, %v2108
        %v2225 = vmul.f32 %v2224, %v2223
        %v2226 = vmul.f32 0.5, %v2225
        %v2227 = vsub.f32 1.5, %v2226
        %v2228 = vmul.f32 %v2223, %v2227
        %vm2229 = vweird.f32 %v2108
        %vm2230 = vweird.f32 %v2223
        %vm2231 = vmor %vm2229, %vm2230
        %v2232 = vsel %vm2231, %v2223, %v2228
        %v2233 = vrsqrt.pop %v2109
        %v2234 = vmul.f32 %v2233, %v2109
        %v2235 = vmul.f32 %v2234, %v2233
        %v2236 = vmul.f32 0.5, %v2235
        %v2237 = vsub.f32 1.5, %v2236
        %v2238 = vmul.f32 %v2233, %v2237
        %vm2239 = vweird.f32 %v2109
        %vm2240 = vweird.f32 %v2233
        %vm2241 = vmor %vm2239, %vm2240
        %v2242 = vsel %vm2241, %v2233, %v2238
        %v2243 = vrsqrt.pop %v2110
        %v2244 = vmul.f32 %v2243, %v2110
        %v2245 = vmul.f32 %v2244, %v2243
        %v2246 = vmul.f32 0.5, %v2245
        %v2247 = vsub.f32 1.5, %v2246
        %v2248 = vmul.f32 %v2243, %v2247
        %vm2249 = vweird.f32 %v2110
        %vm2250 = vweird.f32 %v2243
        %vm2251 = vmor %vm2249, %vm2250
        %v2252 = vsel %vm2251, %v2243, %v2248
        %v2253 = vrsqrt.pop %v2111
        %v2254 = vmul.f32 %v2253, %v2111
        %v2255 = vmul.f32 %v2254, %v2253
        %v2256 = vmul.f32 0.5, %v2255
        %v2257 = vsub.f32 1.5, %v2256
        %v2258 = vmul.f32 %v2253, %v2257
        %vm2259 = vweird.f32 %v2111
        %vm2260 = vweird.f32 %v2253
        %vm2261 = vmor %vm2259, %vm2260
        %v2262 = vsel %vm2261, %v2253, %v2258
        %v2263 = vrsqrt.pop %v2112
        %v2264 = vmul.f32 %v2263, %v2112
        %v2265 = vmul.f32 %v2264, %v2263
        %v2266 = vmul.f32 0.5, %v2265
        %v2267 = vsub.f32 1.5, %v2266
        %v2268 = vmul.f32 %v2263, %v2267
        %vm2269 = vweird.f32 %v2112
        %vm2270 = vweird.f32 %v2263
        %vm2271 = vmor %vm2269, %vm2270
        %v2272 = vsel %vm2271, %v2263, %v2268
        %v2273 = vmul.f32 %v2081, %v2122
        %v2274 = vmul.f32 %v2082, %v2132
        %v2275 = vmul.f32 %v2083, %v2142
        %v2276 = vmul.f32 %v2084, %v2152
        %v2277 = vmul.f32 %v2085, %v2162
        %v2278 = vmul.f32 %v2086, %v2172
        %v2279 = vmul.f32 %v2087, %v2182
        %v2280 = vmul.f32 %v2088, %v2192
        %v2281 = vmul.f32 %v2089, %v2202
        %v2282 = vmul.f32 %v2090, %v2212
        %v2283 = vmul.f32 %v2091, %v2222
        %v2284 = vmul.f32 %v2092, %v2232
        %v2285 = vmul.f32 %v2093, %v2242
        %v2286 = vmul.f32 %v2094, %v2252
        %v2287 = vmul.f32 %v2095, %v2262
        %v2288 = vmul.f32 %v2096, %v2272
        %v2289 = vperm.slane %v1692, 0
        %v2290 = vmul.f32 %v2273, %v2289
        %v2291 = vmul.f32 %v2274, %v2289
        %v2292 = vmul.f32 %v2275, %v2289
        %v2293 = vmul.f32 %v2276, %v2289
        %v2294 = vmul.f32 %v2277, %v2289
        %v2295 = vmul.f32 %v2278, %v2289
        %v2296 = vmul.f32 %v2279, %v2289
        %v2297 = vmul.f32 %v2280, %v2289
        %v2298 = vmul.f32 %v2281, %v2289
        %v2299 = vmul.f32 %v2282, %v2289
        %v2300 = vmul.f32 %v2283, %v2289
        %v2301 = vmul.f32 %v2284, %v2289
        %v2302 = vmul.f32 %v2285, %v2289
        %v2303 = vmul.f32 %v2286, %v2289
        %v2304 = vmul.f32 %v2287, %v2289
        %v2305 = vmul.f32 %v2288, %v2289
        %v2306 = vperm.slane %v1693, 0
        %v2307 = vadd.f32 %v2290, %v2306
        %v2308 = vadd.f32 %v2291, %v2306
        %v2309 = vadd.f32 %v2292, %v2306
        %v2310 = vadd.f32 %v2293, %v2306
        %v2311 = vadd.f32 %v2294, %v2306
        %v2312 = vadd.f32 %v2295, %v2306
        %v2313 = vadd.f32 %v2296, %v2306
        %v2314 = vadd.f32 %v2297, %v2306
        %v2315 = vadd.f32 %v2298, %v2306
        %v2316 = vadd.f32 %v2299, %v2306
        %v2317 = vadd.f32 %v2300, %v2306
        %v2318 = vadd.f32 %v2301, %v2306
        %v2319 = vadd.f32 %v2302, %v2306
        %v2320 = vadd.f32 %v2303, %v2306
        %v2321 = vadd.f32 %v2304, %v2306
        %v2322 = vadd.f32 %v2305, %v2306
        %2323 = vst [vmem:[%s306] sm:$0xff] %v2307
        %2324 = vst [vmem:[%s306 + $0x8] sm:$0xff] %v2308
        %2325 = vst [vmem:[%s306 + $0x10] sm:$0xff] %v2309
        %2326 = vst [vmem:[%s306 + $0x18] sm:$0xff] %v2310
        %2327 = vst [vmem:[%s306 + $0x20] sm:$0xff] %v2311
        %2328 = vst [vmem:[%s306 + $0x28] sm:$0xff] %v2312
        %2329 = vst [vmem:[%s306 + $0x30] sm:$0xff] %v2313
        %2330 = vst [vmem:[%s306 + $0x38] sm:$0xff] %v2314
        %2331 = vst [vmem:[%s306 + $0x40] sm:$0xff] %v2315
        %2332 = vst [vmem:[%s306 + $0x48] sm:$0xff] %v2316
        %2333 = vst [vmem:[%s306 + $0x50] sm:$0xff] %v2317
        %2334 = vst [vmem:[%s306 + $0x58] sm:$0xff] %v2318
        %2335 = vst [vmem:[%s306 + $0x60] sm:$0xff] %v2319
        %2336 = vst [vmem:[%s306 + $0x68] sm:$0xff] %v2320
        %2337 = vst [vmem:[%s306 + $0x70] sm:$0xff] %v2321
        %2338 = vst [vmem:[%s306 + $0x78] sm:$0xff] %v2322
        %s2339 = sand.u32 %s142, 1
        %s2340 = scalar_lea.sflag [#allocation4], %s2339
        %s2341 = sand.u32 %s142, 1
        %s2342 = smul.addr %s2341, 128
        %s2343 = scalar_lea.vmem [#allocation11], %s2342
        // Predicated region
        $region61: #{tpu_custom_call.1} parent=39 // pred_check
          %p2344 = pneg %p152
        $region62: #{tpu_custom_call.1} parent=39 // pred_check_branch
          %2346 = sbr.rel (%p2344) target = $region64
        $region63: #{tpu_custom_call.1} parent=39 // pred_region
          %s2347 = smul.u32 16, %s24
          %2349 = vsyncadd %s2340, 0
          %s2350 = smul.addr %s2347, 8
          %s2351 = scalar_lea.hbm %s5, %s2350
          %s2352 = sshll.u32 %s2343, 4
          %s2353 = int_to_ptr.vmem [resolvable:$true] %s2352
          %s2354 = sshll.u32 %s2351, 4
          %s2355 = int_to_ptr.hbm [resolvable:$true] %s2354
          %2360 = dma.vmem_to_hbm [thread:$0]  %s2353, 2048, %s2355, %s2340, 128, 128, 8
        $region64: #{tpu_custom_call.1} parent=39 // pred_fallthru
          _
      $region40: #{tpu_custom_call.1} parent=5 // pred_fallthru
        _
      %p2361 = scmp.le.s32.totalorder 2, %s19
      // Predicated region
      $region65: #{tpu_custom_call.1} parent=5 // pred_check
        %p2362 = pneg %p2361
      $region66: #{tpu_custom_call.1} parent=5 // pred_check_branch
        %2364 = sbr.rel (%p2362) target = $region68
      $region67: #{tpu_custom_call.1} parent=5 // pred_region
        %s2365 = ssub.s32 %s19, 2
        // Predicated region
        $region69: #{tpu_custom_call.1} parent=67 // pred_check
          %p2366 = pneg %p158
        $region70: #{tpu_custom_call.1} parent=67 // pred_check_branch
          %2368 = sbr.rel (%p2366) target = $region72
        $region71: #{tpu_custom_call.1} parent=67 // pred_region
          %s2369 = sand.u32 %s143, 1
          %s2370 = scalar_lea.sflag [#allocation4], %s2369
          %s2371 = sand.u32 %s143, 1
          %s2372 = smul.addr %s2371, 128
          %s2373 = scalar_lea.vmem [#allocation11], %s2372
          %2375 = dma.done %s2370, 2048
        $region72: #{tpu_custom_call.1} parent=67 // pred_fallthru
          _
      $region68: #{tpu_custom_call.1} parent=5 // pred_fallthru
        _
    $region6: #{tpu_custom_call.1} parent=1 // loop_footer
      %s23 = sadd.s32 1, %s19
    $region7: #{tpu_custom_call.1} parent=1 // loop_footer_branch
      %18 = sbr.rel target = $region3
    $region8: #{tpu_custom_call.1} parent=1 // loop_exit
      _
    %2376 = vsyncpa [#allocation3], 1
    %s2377 = scalar_lea.sflag [#allocation3], 1
    %2378 = vsyncpa %s2377, 1
    %2379 = vsyncpa [#allocation6], 1
    %2380 = vsyncpa [#allocation9], 1
    %2381 = vsyncpa [#allocation4], 1
    %s2382 = scalar_lea.sflag [#allocation4], 1
    %2383 = vsyncpa %s2382, 1

</llo_original>
